<compile_context>
chip_gen: v7x
topology: tpu7x:2x2x1
jax: 0.10.0
libtpu: 0.0.40
codegen_flags: <defaults>
</compile_context>

<pallas_src>
import functools
import numpy as np

import jax
import jax.numpy as jnp
from jax.experimental import pallas as pl
from jax.experimental.pallas import tpu as pltpu


# ----------------------------------------------------------------------------
# In-kernel math helpers (only ops guaranteed to lower on all TPU generations)
# ----------------------------------------------------------------------------
def _erf(x):
    # Abramowitz & Stegun 7.1.26 rational approximation, |err| < 1.5e-7.
    a1, a2, a3, a4, a5 = 0.254829592, -0.284496736, 1.421413741, -1.453152027, 1.061405429
    p = 0.3275911
    sgn = jnp.where(x < 0.0, -1.0, 1.0)
    ax = jnp.abs(x)
    t = 1.0 / (1.0 + p * ax)
    poly = ((((a5 * t + a4) * t + a3) * t + a2) * t + a1) * t
    return sgn * (1.0 - poly * jnp.exp(-ax * ax))


def _gelu_exact(x):
    # nn.GELU() default (erf-based), matching the PyTorch reference.
    return 0.5 * x * (1.0 + _erf(x * (1.0 / np.sqrt(2.0))))


# ----------------------------------------------------------------------------
# Fused layer kernel: attention block + feed-forward block for bB batch elements / step
# ----------------------------------------------------------------------------
def _fused_layer_kernel(*refs, heads, dim_head, n_channels, scale):
    f32, bf16 = jnp.float32, jnp.bfloat16
    inner = heads * dim_head

    # ---- parse the variadic ref list --------------------------------------
    idx = 0
    x_ref = refs[idx]; idx += 1
    ch_refs = refs[idx:idx + n_channels]; idx += n_channels
    wq_ref = refs[idx]; idx += 1
    wkv_refs = refs[idx:idx + n_channels]; idx += n_channels
    (wo_ref, bo_ref, g_ref, beta_ref,
     w1_ref, b1_ref, w2_ref, b2_ref) = refs[idx:idx + 8]
    o_ref = refs[idx + 8]

    bB, N, Dq = x_ref.shape
    M = bB * N                                     # batch folded into matmul rows

    x_in = x_ref[...]                              # (bB, N, Dq), native dtype (bf16 ok)
    x2 = x_in.reshape(M, Dq)
    x2_f32 = x2.astype(f32)
    x2_bf = x2.astype(bf16)

    # ---- Attention: fused projections, M = bB*N rows -----------------------
    q = jnp.dot(x2_bf, wq_ref[...], preferred_element_type=f32).astype(bf16)   # (M, inner)

    # kv = sum_i x_i @ wkv_rows_i  (mathematically identical to concat(x_i) @ wkv,
    # but the (B, N, Dkv) x_agg concat never hits HBM)
    kv = None
    for ci in range(n_channels):
        tc = ch_refs[ci].shape[-1]
        xc = ch_refs[ci][...].reshape(M, tc).astype(bf16)
        part = jnp.dot(xc, wkv_refs[ci][...], preferred_element_type=f32)      # (M, 2*inner)
        kv = part if kv is None else kv + part
    kv = kv.astype(bf16)                           # single hoisted bf16 cast
    k = kv[:, :inner]
    v = kv[:, inner:]

    # ---- Per-head softmax attention, batched over the bB batch elements ----
    # TODO(synk): replace the static head loop with one head-batched dot once the
    # (bB, N, h, d) -> (bB*h, N, d) relayout lowers reliably; heads is small & static.
    head_outs = []
    for h in range(heads):
        lo = h * dim_head
        qh = q[:, lo:lo + dim_head].reshape(bB, N, dim_head)
        kh = k[:, lo:lo + dim_head].reshape(bB, N, dim_head)
        vh = v[:, lo:lo + dim_head].reshape(bB, N, dim_head)
        s = jnp.einsum('bqd,bkd->bqk', qh, kh,
                       preferred_element_type=f32) * scale                     # (bB, N, N)
        s = s - jnp.max(s, axis=-1, keepdims=True)
        p = jnp.exp(s)
        p = p * pl.reciprocal(jnp.sum(p, axis=-1, keepdims=True), approx=False)
        oh = jnp.einsum('bqk,bkd->bqd', p.astype(bf16), vh,
                        preferred_element_type=f32)                            # (bB, N, d)
        head_outs.append(oh)

    # One fused output projection (K = inner) instead of heads x K=dim_head dots.
    o_cat = jnp.concatenate(head_outs, axis=-1).reshape(M, inner)
    attn = jnp.dot(o_cat.astype(bf16), wo_ref[...],
                   preferred_element_type=f32) + bo_ref[...]
    x1 = x2_f32 + attn                             # residual 1 (f32)

    # ---- FeedForward: LayerNorm -> Linear -> GELU -> Linear, residual ------
    mu = jnp.mean(x1, axis=-1, keepdims=True)
    var = jnp.mean(jnp.square(x1 - mu), axis=-1, keepdims=True)
    xn = (x1 - mu) * jax.lax.rsqrt(var + 1e-5) * g_ref[...] + beta_ref[...]
    h1 = jnp.dot(xn.astype(bf16), w1_ref[...], preferred_element_type=f32) + b1_ref[...]
    h1 = _gelu_exact(h1)
    y = jnp.dot(h1.astype(bf16), w2_ref[...], preferred_element_type=f32) + b2_ref[...]

    o_ref[...] = (x1 + y).reshape(bB, N, Dq).astype(o_ref.dtype)   # residual 2


# ----------------------------------------------------------------------------
# Wrapper
# ----------------------------------------------------------------------------
def cross_channel_transformer_encoder_layer(params, x, other_channels_output, *,
                                            heads, dim_head, batch_block=None):
    """x: (B, N, Dq); other_channels_output: list of (B, N, t_i). Returns (B, N, Dq) f32."""
    channels = list(other_channels_output)
    n_channels = len(channels)
    B, N, Dq = x.shape
    inner = heads * dim_head
    H = params['w1'].shape[1]
    Dkv = sum(int(c.shape[-1]) for c in channels)

    # Fold several batch elements into each grid step so every matmul sees ~128 rows.
    # (On v7x, with large B this also leaves >=2 "parallel" grid units for the 2 TCs.)
    if batch_block is None:
        batch_block = max(1, min(B, -(-128 // N)))
        while B % batch_block:
            batch_block -= 1
    bB = batch_block
    grid = (B // bB,)

    kernel = functools.partial(_fused_layer_kernel, heads=heads, dim_head=dim_head,
                               n_channels=n_channels, scale=float(dim_head) ** -0.5)

    weight_args = [params['wq'], *params['wkv_list'], params['wo'], params['bo'],
                   params['ln_g'], params['ln_b'], params['w1'], params['b1'],
                   params['w2'], params['b2']]
    weight_bytes = sum(int(np.prod(w.shape)) * jnp.dtype(w.dtype).itemsize
                       for w in weight_args)
    block_act_bytes = (bB * N * Dq * (x.dtype.itemsize + 4)
                       + sum(bB * N * int(c.shape[-1]) * c.dtype.itemsize for c in channels))
    # Weights counted once + double-buffered activation blocks + slack; safe on 64 MiB v7x.
    vmem_limit = int(min(48 << 20, max(8 << 20, 2 * weight_bytes + 4 * block_act_bytes + (2 << 20))))

    # Advisory cost estimate (GELU uses 1 exp per element via the erf approximation).
    flops = int(2 * B * N * (Dq * inner + Dkv * 2 * inner + 2 * N * inner
                             + inner * Dq + Dq * H + H * Dq))
    transcendentals = int(B * N * (heads * N + H))
    bytes_accessed = int(B * N * Dq * x.dtype.itemsize
                         + sum(B * N * int(c.shape[-1]) * c.dtype.itemsize for c in channels)
                         + B * N * Dq * 4
                         + weight_bytes)

    def weight_spec(arr):
        shape = arr.shape
        return pl.BlockSpec(shape, lambda i: (0,) * len(shape))   # resident across grid

    in_specs = ([pl.BlockSpec((bB, N, Dq), lambda i: (i, 0, 0))]
                + [pl.BlockSpec((bB, N, int(c.shape[-1])), lambda i: (i, 0, 0))
                   for c in channels]
                + [weight_spec(params['wq'])]
                + [weight_spec(w) for w in params['wkv_list']]
                + [weight_spec(params['wo']), weight_spec(params['bo']),
                   weight_spec(params['ln_g']), weight_spec(params['ln_b']),
                   weight_spec(params['w1']), weight_spec(params['b1']),
                   weight_spec(params['w2']), weight_spec(params['b2'])])

    return pl.pallas_call(
        kernel,
        out_shape=jax.ShapeDtypeStruct((B, N, Dq), jnp.float32),
        grid_spec=pltpu.PrefetchScalarGridSpec(
            num_scalar_prefetch=0,
            grid=grid,
            in_specs=in_specs,
            out_specs=pl.BlockSpec((bB, N, Dq), lambda i: (i, 0, 0)),
        ),
        compiler_params=pltpu.CompilerParams(
            dimension_semantics=("parallel",),
            vmem_limit_bytes=vmem_limit),
        cost_estimate=pl.CostEstimate(flops=flops, transcendentals=transcendentals,
                                      bytes_accessed=bytes_accessed),
    )(x, *channels, params['wq'], *params['wkv_list'], params['wo'], params['bo'],
      params['ln_g'], params['ln_b'], params['w1'], params['b1'],
      params['w2'], params['b2'])


# ----------------------------------------------------------------------------
# Parameter init (torch-default-style U(-1/sqrt(fan_in), 1/sqrt(fan_in)))
# ----------------------------------------------------------------------------
def init_layer_params(key, q_dim, channel_dims, heads, dim_head, hidden_dim):
    inner = heads * dim_head
    assert not (heads == 1 and dim_head == q_dim)   # reference requires project_out=True
    kv_dim = sum(channel_dims)
    ks = jax.random.split(key, 9)

    def w(k, fi, fo):
        b = 1.0 / np.sqrt(fi)
        return jax.random.uniform(k, (fi, fo), jnp.float32, -b, b)

    def bias(k, fi, fo):
        b = 1.0 / np.sqrt(fi)
        return jax.random.uniform(k, (1, fo), jnp.float32, -b, b)

    wq = w(ks[0], q_dim, inner)
    wk = w(ks[1], kv_dim, inner)
    wv = w(ks[2], kv_dim, inner)
    wkv = jnp.concatenate([wk, wv], axis=1)        # (kv_dim, 2*inner), fused K|V
    # Split the fused K|V weights by channel rows so the kernel accumulates per-channel
    # matmuls instead of needing a concatenated x_agg in HBM.
    offs = np.cumsum([0] + list(channel_dims))
    wkv_list = [wkv[int(offs[i]):int(offs[i + 1])].astype(jnp.bfloat16)
                for i in range(len(channel_dims))]
    return {
        'wq':       wq.astype(jnp.bfloat16),
        'wkv_list': wkv_list,
        'wo':       w(ks[3], inner, q_dim).astype(jnp.bfloat16),
        'bo':       bias(ks[4], inner, q_dim),
        'ln_g':     jnp.ones((1, q_dim), jnp.float32),
        'ln_b':     jnp.zeros((1, q_dim), jnp.float32),
        'w1':       w(ks[5], q_dim, hidden_dim).astype(jnp.bfloat16),
        'b1':       bias(ks[6], q_dim, hidden_dim),
        'w2':       w(ks[7], hidden_dim, q_dim).astype(jnp.bfloat16),
        'b2':       bias(ks[8], hidden_dim, q_dim),
    }


# ----------------------------------------------------------------------------
# Pure-JAX f32 reference (kernel matmuls run in bf16 -> loose tolerance)
# ----------------------------------------------------------------------------
def reference_layer(params, x, other_channels_output, *, heads, dim_head):
    f32 = jnp.float32
    inner = heads * dim_head
    x = x.astype(f32)
    xa = jnp.concatenate([c.astype(f32) for c in other_channels_output], axis=-1)
    B, N, Dq = x.shape
    wq = params['wq'].astype(f32)
    wkv = jnp.concatenate([w.astype(f32) for w in params['wkv_list']], axis=0)
    wk, wv = wkv[:, :inner], wkv[:, inner:]
    wo = params['wo'].astype(f32)

    def split_heads(t):
        return t.reshape(B, N, heads, dim_head).transpose(0, 2, 1, 3)

    qh, kh, vh = split_heads(x @ wq), split_heads(xa @ wk), split_heads(xa @ wv)
    s = jnp.einsum('bhnd,bhmd->bhnm', qh, kh) * (float(dim_head) ** -0.5)
    p = jax.nn.softmax(s, axis=-1)
    o = jnp.einsum('bhnm,bhmd->bhnd', p, vh).transpose(0, 2, 1, 3).reshape(B, N, inner)
    x1 = x + o @ wo + params['bo'][0]

    mu = jnp.mean(x1, axis=-1, keepdims=True)
    var = jnp.mean(jnp.square(x1 - mu), axis=-1, keepdims=True)
    xn = (x1 - mu) * jax.lax.rsqrt(var + 1e-5) * params['ln_g'][0] + params['ln_b'][0]
    h1 = jax.nn.gelu(xn @ params['w1'].astype(f32) + params['b1'][0], approximate=False)
    y = h1 @ params['w2'].astype(f32) + params['b2'][0]
    return x1 + y


# ----------------------------------------------------------------------------
if __name__ == "__main__":
    # x is (batch, num_kernel, time) as in MultiChannelDeformer; the layer sees
    # input_dimension = this modality's time dim, channels_time_dims = the others'.
    batch, seq = 2, 8
    input_dimension = 128                       # lane-dense output slab
    channels_time_dims = [64, 32]               # two other modalities -> kv_dim = 96
    heads, dim_head, mlp_dim = 2, 16, 16
    hidden_dim = mlp_dim + mlp_dim * len(channels_time_dims)   # FeedForward hidden dim

    root = jax.random.PRNGKey(0)
    keys = jax.random.split(root, 2 + len(channels_time_dims))
    params = init_layer_params(keys[0], input_dimension, channels_time_dims,
                               heads, dim_head, hidden_dim)

    # bf16 activations at the kernel boundary (halves the input DMA bytes).
    x = jax.random.normal(keys[1], (batch, seq, input_dimension),
                          jnp.float32).astype(jnp.bfloat16)
    others = [jax.random.normal(keys[2 + i], (batch, seq, t),
                                jnp.float32).astype(jnp.bfloat16)
              for i, t in enumerate(channels_time_dims)]

    fwd = jax.jit(functools.partial(cross_channel_transformer_encoder_layer,
                                    heads=heads, dim_head=dim_head))
    out = jax.block_until_ready(fwd(params, x, others))

    assert out.shape == (batch, seq, input_dimension), out.shape
    assert bool(jnp.all(jnp.isfinite(out)))

    # Parity check against an f32 reference built from the same (bf16-rounded) inputs.
    ref = reference_layer(params, x, others, heads=heads, dim_head=dim_head)
    err = float(jnp.max(jnp.abs(out - ref)))
    assert err < 0.25, f"max abs err {err}"

    print("KERNEL_OK")
</pallas_src>

<mosaic_0001>
module attributes {stable_mosaic.version = 11 : i64} {
  func.func @_fused_layer_kernel(%arg0: i32, %arg1: memref<2x8x128xbf16, #tpu.memory_space<vmem>>, %arg2: memref<2x8x64xbf16, #tpu.memory_space<vmem>>, %arg3: memref<2x8x32xbf16, #tpu.memory_space<vmem>>, %arg4: memref<128x32xbf16, #tpu.memory_space<vmem>>, %arg5: memref<64x64xbf16, #tpu.memory_space<vmem>>, %arg6: memref<32x64xbf16, #tpu.memory_space<vmem>>, %arg7: memref<32x128xbf16, #tpu.memory_space<vmem>>, %arg8: memref<1x128xf32, #tpu.memory_space<vmem>>, %arg9: memref<1x128xf32, #tpu.memory_space<vmem>>, %arg10: memref<1x128xf32, #tpu.memory_space<vmem>>, %arg11: memref<128x48xbf16, #tpu.memory_space<vmem>>, %arg12: memref<1x48xf32, #tpu.memory_space<vmem>>, %arg13: memref<48x128xbf16, #tpu.memory_space<vmem>>, %arg14: memref<1x128xf32, #tpu.memory_space<vmem>>, %arg15: memref<2x8x128xf32, #tpu.memory_space<vmem>>) attributes {dimension_semantics = [#tpu.dimension_semantics<parallel>], iteration_bounds = array<i64: 1>, scalar_prefetch = 0 : i64, scratch_operands = 0 : i64, tpu.core_type = #tpu.core_type<tc>, window_params = [{transform_indices = @transform_0, window_bounds = array<i64: 2, 8, 128>}, {transform_indices = @transform_1, window_bounds = array<i64: 2, 8, 64>}, {transform_indices = @transform_2, window_bounds = array<i64: 2, 8, 32>}, {pipeline_mode = #tpu.pipeline_mode<synchronous>, transform_indices = @transform_3, window_bounds = array<i64: 128, 32>}, {pipeline_mode = #tpu.pipeline_mode<synchronous>, transform_indices = @transform_4, window_bounds = array<i64: 64, 64>}, {pipeline_mode = #tpu.pipeline_mode<synchronous>, transform_indices = @transform_5, window_bounds = array<i64: 32, 64>}, {pipeline_mode = #tpu.pipeline_mode<synchronous>, transform_indices = @transform_6, window_bounds = array<i64: 32, 128>}, {pipeline_mode = #tpu.pipeline_mode<synchronous>, transform_indices = @transform_7, window_bounds = array<i64: 1, 128>}, {pipeline_mode = #tpu.pipeline_mode<synchronous>, transform_indices = @transform_8, window_bounds = array<i64: 1, 128>}, {pipeline_mode = #tpu.pipeline_mode<synchronous>, transform_indices = @transform_9, window_bounds = array<i64: 1, 128>}, {pipeline_mode = #tpu.pipeline_mode<synchronous>, transform_indices = @transform_10, window_bounds = array<i64: 128, 48>}, {pipeline_mode = #tpu.pipeline_mode<synchronous>, transform_indices = @transform_11, window_bounds = array<i64: 1, 48>}, {pipeline_mode = #tpu.pipeline_mode<synchronous>, transform_indices = @transform_12, window_bounds = array<i64: 48, 128>}, {pipeline_mode = #tpu.pipeline_mode<synchronous>, transform_indices = @transform_13, window_bounds = array<i64: 1, 128>}, {transform_indices = @transform_14, window_bounds = array<i64: 2, 8, 128>}]} {
    %c0 = arith.constant 0 : index
    %c0_0 = arith.constant 0 : index
    %c0_1 = arith.constant 0 : index
    %0 = vector.load %arg1[%c0, %c0_0, %c0_1] : memref<2x8x128xbf16, #tpu.memory_space<vmem>>, vector<2x8x128xbf16>
    %1 = vector.shape_cast %0 : vector<2x8x128xbf16> to vector<16x128xbf16>
    %2 = arith.extf %1 : vector<16x128xbf16> to vector<16x128xf32>
    %c0_2 = arith.constant 0 : index
    %c0_3 = arith.constant 0 : index
    %3 = vector.load %arg4[%c0_2, %c0_3] : memref<128x32xbf16, #tpu.memory_space<vmem>>, vector<128x32xbf16>
    %cst = arith.constant dense<0.000000e+00> : vector<16x32xf32>
    %4 = tpu.matmul %1, %3, %cst {dimension_numbers = #tpu.dot_dimension_numbers<[1], [0], [0], [1], [0, 0, 1, 1], [], []>} : vector<16x128xbf16>, vector<128x32xbf16>, vector<16x32xf32> -> vector<16x32xf32>
    %5 = arith.truncf %4 : vector<16x32xf32> to vector<16x32xbf16>
    %c0_4 = arith.constant 0 : index
    %c0_5 = arith.constant 0 : index
    %c0_6 = arith.constant 0 : index
    %6 = vector.load %arg2[%c0_4, %c0_5, %c0_6] : memref<2x8x64xbf16, #tpu.memory_space<vmem>>, vector<2x8x64xbf16>
    %7 = vector.shape_cast %6 : vector<2x8x64xbf16> to vector<16x64xbf16>
    %c0_7 = arith.constant 0 : index
    %c0_8 = arith.constant 0 : index
    %8 = vector.load %arg5[%c0_7, %c0_8] : memref<64x64xbf16, #tpu.memory_space<vmem>>, vector<64x64xbf16>
    %cst_9 = arith.constant dense<0.000000e+00> : vector<16x64xf32>
    %9 = tpu.matmul %7, %8, %cst_9 {dimension_numbers = #tpu.dot_dimension_numbers<[1], [0], [0], [1], [0, 0, 1, 1], [], []>} : vector<16x64xbf16>, vector<64x64xbf16>, vector<16x64xf32> -> vector<16x64xf32>
    %c0_10 = arith.constant 0 : index
    %c0_11 = arith.constant 0 : index
    %c0_12 = arith.constant 0 : index
    %10 = vector.load %arg3[%c0_10, %c0_11, %c0_12] : memref<2x8x32xbf16, #tpu.memory_space<vmem>>, vector<2x8x32xbf16>
    %11 = vector.shape_cast %10 : vector<2x8x32xbf16> to vector<16x32xbf16>
    %c0_13 = arith.constant 0 : index
    %c0_14 = arith.constant 0 : index
    %12 = vector.load %arg6[%c0_13, %c0_14] : memref<32x64xbf16, #tpu.memory_space<vmem>>, vector<32x64xbf16>
    %cst_15 = arith.constant dense<0.000000e+00> : vector<16x64xf32>
    %13 = tpu.matmul %11, %12, %cst_15 {dimension_numbers = #tpu.dot_dimension_numbers<[1], [0], [0], [1], [0, 0, 1, 1], [], []>} : vector<16x32xbf16>, vector<32x64xbf16>, vector<16x64xf32> -> vector<16x64xf32>
    %14 = arith.addf %9, %13 : vector<16x64xf32>
    %15 = arith.truncf %14 : vector<16x64xf32> to vector<16x64xbf16>
    %16 = vector.extract_strided_slice %15 {offsets = [0, 0], sizes = [16, 32], strides = [1, 1]} : vector<16x64xbf16> to vector<16x32xbf16>
    %17 = vector.extract_strided_slice %15 {offsets = [0, 32], sizes = [16, 32], strides = [1, 1]} : vector<16x64xbf16> to vector<16x32xbf16>
    %18 = vector.extract_strided_slice %5 {offsets = [0, 0], sizes = [16, 16], strides = [1, 1]} : vector<16x32xbf16> to vector<16x16xbf16>
    %19 = vector.shape_cast %18 : vector<16x16xbf16> to vector<2x8x16xbf16>
    %20 = vector.extract_strided_slice %16 {offsets = [0, 0], sizes = [16, 16], strides = [1, 1]} : vector<16x32xbf16> to vector<16x16xbf16>
    %21 = vector.shape_cast %20 : vector<16x16xbf16> to vector<2x8x16xbf16>
    %22 = vector.extract_strided_slice %17 {offsets = [0, 0], sizes = [16, 16], strides = [1, 1]} : vector<16x32xbf16> to vector<16x16xbf16>
    %23 = vector.shape_cast %22 : vector<16x16xbf16> to vector<2x8x16xbf16>
    "tpu.trace_start"() <{level = 10 : i32, message = "bqd,bkd->bqk"}> : () -> ()
    %cst_16 = arith.constant dense<0.000000e+00> : vector<2x8x8xf32>
    %24 = tpu.matmul %19, %21, %cst_16 {dimension_numbers = #tpu.dot_dimension_numbers<[2], [2], [1], [1], [0, 0, 0, 1, 1, 1], [0], [0]>} : vector<2x8x16xbf16>, vector<2x8x16xbf16>, vector<2x8x8xf32> -> vector<2x8x8xf32>
    "tpu.trace_stop"() : () -> ()
    %cst_17 = arith.constant 2.500000e-01 : f32
    %25 = vector.broadcast %cst_17 : f32 to vector<2x8x8xf32>
    %26 = arith.mulf %24, %25 : vector<2x8x8xf32>
    %cst_18 = arith.constant dense<0xFF800000> : vector<2x8xf32>
    %27 = vector.multi_reduction <maximumf>, %26, %cst_18 [2] : vector<2x8x8xf32> to vector<2x8xf32>
    %28 = vector.shape_cast %27 : vector<2x8xf32> to vector<2x8x1xf32>
    %29 = vector.broadcast %28 : vector<2x8x1xf32> to vector<2x8x8xf32>
    %30 = arith.subf %26, %29 : vector<2x8x8xf32>
    %31 = math.exp %30 : vector<2x8x8xf32>
    %cst_19 = arith.constant dense<0.000000e+00> : vector<2x8xf32>
    %32 = vector.multi_reduction <add>, %31, %cst_19 [2] : vector<2x8x8xf32> to vector<2x8xf32>
    %33 = vector.shape_cast %32 : vector<2x8xf32> to vector<2x8x1xf32>
    %34 = tpu.reciprocal %33 : vector<2x8x1xf32> -> vector<2x8x1xf32>
    %35 = vector.broadcast %34 : vector<2x8x1xf32> to vector<2x8x8xf32>
    %36 = arith.mulf %31, %35 : vector<2x8x8xf32>
    %37 = arith.truncf %36 : vector<2x8x8xf32> to vector<2x8x8xbf16>
    "tpu.trace_start"() <{level = 10 : i32, message = "bqk,bkd->bqd"}> : () -> ()
    %cst_20 = arith.constant dense<0.000000e+00> : vector<2x8x16xf32>
    %38 = tpu.matmul %37, %23, %cst_20 {dimension_numbers = #tpu.dot_dimension_numbers<[2], [1], [1], [2], [0, 0, 0, 1, 1, 2], [0], [0]>} : vector<2x8x8xbf16>, vector<2x8x16xbf16>, vector<2x8x16xf32> -> vector<2x8x16xf32>
    "tpu.trace_stop"() : () -> ()
    %39 = vector.extract_strided_slice %5 {offsets = [0, 16], sizes = [16, 16], strides = [1, 1]} : vector<16x32xbf16> to vector<16x16xbf16>
    %40 = vector.shape_cast %39 : vector<16x16xbf16> to vector<2x8x16xbf16>
    %41 = vector.extract_strided_slice %16 {offsets = [0, 16], sizes = [16, 16], strides = [1, 1]} : vector<16x32xbf16> to vector<16x16xbf16>
    %42 = vector.shape_cast %41 : vector<16x16xbf16> to vector<2x8x16xbf16>
    %43 = vector.extract_strided_slice %17 {offsets = [0, 16], sizes = [16, 16], strides = [1, 1]} : vector<16x32xbf16> to vector<16x16xbf16>
    %44 = vector.shape_cast %43 : vector<16x16xbf16> to vector<2x8x16xbf16>
    "tpu.trace_start"() <{level = 10 : i32, message = "bqd,bkd->bqk"}> : () -> ()
    %cst_21 = arith.constant dense<0.000000e+00> : vector<2x8x8xf32>
    %45 = tpu.matmul %40, %42, %cst_21 {dimension_numbers = #tpu.dot_dimension_numbers<[2], [2], [1], [1], [0, 0, 0, 1, 1, 1], [0], [0]>} : vector<2x8x16xbf16>, vector<2x8x16xbf16>, vector<2x8x8xf32> -> vector<2x8x8xf32>
    "tpu.trace_stop"() : () -> ()
    %cst_22 = arith.constant 2.500000e-01 : f32
    %46 = vector.broadcast %cst_22 : f32 to vector<2x8x8xf32>
    %47 = arith.mulf %45, %46 : vector<2x8x8xf32>
    %cst_23 = arith.constant dense<0xFF800000> : vector<2x8xf32>
    %48 = vector.multi_reduction <maximumf>, %47, %cst_23 [2] : vector<2x8x8xf32> to vector<2x8xf32>
    %49 = vector.shape_cast %48 : vector<2x8xf32> to vector<2x8x1xf32>
    %50 = vector.broadcast %49 : vector<2x8x1xf32> to vector<2x8x8xf32>
    %51 = arith.subf %47, %50 : vector<2x8x8xf32>
    %52 = math.exp %51 : vector<2x8x8xf32>
    %cst_24 = arith.constant dense<0.000000e+00> : vector<2x8xf32>
    %53 = vector.multi_reduction <add>, %52, %cst_24 [2] : vector<2x8x8xf32> to vector<2x8xf32>
    %54 = vector.shape_cast %53 : vector<2x8xf32> to vector<2x8x1xf32>
    %55 = tpu.reciprocal %54 : vector<2x8x1xf32> -> vector<2x8x1xf32>
    %56 = vector.broadcast %55 : vector<2x8x1xf32> to vector<2x8x8xf32>
    %57 = arith.mulf %52, %56 : vector<2x8x8xf32>
    %58 = arith.truncf %57 : vector<2x8x8xf32> to vector<2x8x8xbf16>
    "tpu.trace_start"() <{level = 10 : i32, message = "bqk,bkd->bqd"}> : () -> ()
    %cst_25 = arith.constant dense<0.000000e+00> : vector<2x8x16xf32>
    %59 = tpu.matmul %58, %44, %cst_25 {dimension_numbers = #tpu.dot_dimension_numbers<[2], [1], [1], [2], [0, 0, 0, 1, 1, 2], [0], [0]>} : vector<2x8x8xbf16>, vector<2x8x16xbf16>, vector<2x8x16xf32> -> vector<2x8x16xf32>
    "tpu.trace_stop"() : () -> ()
    %60 = tpu.concatenate %38, %59 in 2 : vector<2x8x16xf32>, vector<2x8x16xf32> -> vector<2x8x32xf32>
    %61 = vector.shape_cast %60 : vector<2x8x32xf32> to vector<16x32xf32>
    %62 = arith.truncf %61 : vector<16x32xf32> to vector<16x32xbf16>
    %c0_26 = arith.constant 0 : index
    %c0_27 = arith.constant 0 : index
    %63 = vector.load %arg7[%c0_26, %c0_27] : memref<32x128xbf16, #tpu.memory_space<vmem>>, vector<32x128xbf16>
    %cst_28 = arith.constant dense<0.000000e+00> : vector<16x128xf32>
    %64 = tpu.matmul %62, %63, %cst_28 {dimension_numbers = #tpu.dot_dimension_numbers<[1], [0], [0], [1], [0, 0, 1, 1], [], []>} : vector<16x32xbf16>, vector<32x128xbf16>, vector<16x128xf32> -> vector<16x128xf32>
    %c0_29 = arith.constant 0 : index
    %c0_30 = arith.constant 0 : index
    %65 = vector.load %arg8[%c0_29, %c0_30] : memref<1x128xf32, #tpu.memory_space<vmem>>, vector<1x128xf32>
    %66 = vector.broadcast %65 : vector<1x128xf32> to vector<16x128xf32>
    %67 = arith.addf %64, %66 : vector<16x128xf32>
    %68 = arith.addf %2, %67 : vector<16x128xf32>
    %cst_31 = arith.constant dense<0.000000e+00> : vector<16xf32>
    %69 = vector.multi_reduction <add>, %68, %cst_31 [1] : vector<16x128xf32> to vector<16xf32>
    %70 = vector.shape_cast %69 : vector<16xf32> to vector<16x1xf32>
    %cst_32 = arith.constant 1.280000e+02 : f32
    %71 = vector.broadcast %cst_32 : f32 to vector<16x1xf32>
    %72 = arith.divf %70, %71 : vector<16x1xf32>
    %73 = vector.broadcast %72 : vector<16x1xf32> to vector<16x128xf32>
    %74 = arith.subf %68, %73 : vector<16x128xf32>
    %75 = arith.mulf %74, %74 : vector<16x128xf32>
    %cst_33 = arith.constant dense<0.000000e+00> : vector<16xf32>
    %76 = vector.multi_reduction <add>, %75, %cst_33 [1] : vector<16x128xf32> to vector<16xf32>
    %77 = vector.shape_cast %76 : vector<16xf32> to vector<16x1xf32>
    %cst_34 = arith.constant 1.280000e+02 : f32
    %78 = vector.broadcast %cst_34 : f32 to vector<16x1xf32>
    %79 = arith.divf %77, %78 : vector<16x1xf32>
    %80 = vector.broadcast %72 : vector<16x1xf32> to vector<16x128xf32>
    %81 = arith.subf %68, %80 : vector<16x128xf32>
    %cst_35 = arith.constant 9.99999974E-6 : f32
    %82 = vector.broadcast %cst_35 : f32 to vector<16x1xf32>
    %83 = arith.addf %79, %82 : vector<16x1xf32>
    %84 = math.rsqrt %83 : vector<16x1xf32>
    %85 = vector.broadcast %84 : vector<16x1xf32> to vector<16x128xf32>
    %86 = arith.mulf %81, %85 : vector<16x128xf32>
    %c0_36 = arith.constant 0 : index
    %c0_37 = arith.constant 0 : index
    %87 = vector.load %arg9[%c0_36, %c0_37] : memref<1x128xf32, #tpu.memory_space<vmem>>, vector<1x128xf32>
    %88 = vector.broadcast %87 : vector<1x128xf32> to vector<16x128xf32>
    %89 = arith.mulf %86, %88 : vector<16x128xf32>
    %c0_38 = arith.constant 0 : index
    %c0_39 = arith.constant 0 : index
    %90 = vector.load %arg10[%c0_38, %c0_39] : memref<1x128xf32, #tpu.memory_space<vmem>>, vector<1x128xf32>
    %91 = vector.broadcast %90 : vector<1x128xf32> to vector<16x128xf32>
    %92 = arith.addf %89, %91 : vector<16x128xf32>
    %93 = arith.truncf %92 : vector<16x128xf32> to vector<16x128xbf16>
    %c0_40 = arith.constant 0 : index
    %c0_41 = arith.constant 0 : index
    %94 = vector.load %arg11[%c0_40, %c0_41] : memref<128x48xbf16, #tpu.memory_space<vmem>>, vector<128x48xbf16>
    %cst_42 = arith.constant dense<0.000000e+00> : vector<16x48xf32>
    %95 = tpu.matmul %93, %94, %cst_42 {dimension_numbers = #tpu.dot_dimension_numbers<[1], [0], [0], [1], [0, 0, 1, 1], [], []>} : vector<16x128xbf16>, vector<128x48xbf16>, vector<16x48xf32> -> vector<16x48xf32>
    %c0_43 = arith.constant 0 : index
    %c0_44 = arith.constant 0 : index
    %96 = vector.load %arg12[%c0_43, %c0_44] : memref<1x48xf32, #tpu.memory_space<vmem>>, vector<1x48xf32>
    %97 = vector.broadcast %96 : vector<1x48xf32> to vector<16x48xf32>
    %98 = arith.addf %95, %97 : vector<16x48xf32>
    %cst_45 = arith.constant 5.000000e-01 : f32
    %99 = vector.broadcast %cst_45 : f32 to vector<16x48xf32>
    %100 = arith.mulf %99, %98 : vector<16x48xf32>
    %cst_46 = arith.constant 0.707106769 : f32
    %101 = vector.broadcast %cst_46 : f32 to vector<16x48xf32>
    %102 = arith.mulf %98, %101 : vector<16x48xf32>
    %cst_47 = arith.constant 0.000000e+00 : f32
    %103 = vector.broadcast %cst_47 : f32 to vector<16x48xf32>
    %104 = arith.cmpf olt, %102, %103 : vector<16x48xf32>
    %cst_48 = arith.constant -1.000000e+00 : f32
    %cst_49 = arith.constant 1.000000e+00 : f32
    %105 = vector.broadcast %cst_48 : f32 to vector<16x48xf32>
    %106 = vector.broadcast %cst_49 : f32 to vector<16x48xf32>
    %107 = arith.select %104, %105, %106 : vector<16x48xi1>, vector<16x48xf32>
    %108 = math.absf %102 : vector<16x48xf32>
    %cst_50 = arith.constant 0.327591091 : f32
    %109 = vector.broadcast %cst_50 : f32 to vector<16x48xf32>
    %110 = arith.mulf %109, %108 : vector<16x48xf32>
    %cst_51 = arith.constant 1.000000e+00 : f32
    %111 = vector.broadcast %cst_51 : f32 to vector<16x48xf32>
    %112 = arith.addf %111, %110 : vector<16x48xf32>
    %cst_52 = arith.constant 1.000000e+00 : f32
    %113 = vector.broadcast %cst_52 : f32 to vector<16x48xf32>
    %114 = arith.divf %113, %112 : vector<16x48xf32>
    %cst_53 = arith.constant 1.06140542 : f32
    %115 = vector.broadcast %cst_53 : f32 to vector<16x48xf32>
    %116 = arith.mulf %115, %114 : vector<16x48xf32>
    %cst_54 = arith.constant -1.45315206 : f32
    %117 = vector.broadcast %cst_54 : f32 to vector<16x48xf32>
    %118 = arith.addf %116, %117 : vector<16x48xf32>
    %119 = arith.mulf %118, %114 : vector<16x48xf32>
    %cst_55 = arith.constant 1.42141378 : f32
    %120 = vector.broadcast %cst_55 : f32 to vector<16x48xf32>
    %121 = arith.addf %119, %120 : vector<16x48xf32>
    %122 = arith.mulf %121, %114 : vector<16x48xf32>
    %cst_56 = arith.constant -0.284496725 : f32
    %123 = vector.broadcast %cst_56 : f32 to vector<16x48xf32>
    %124 = arith.addf %122, %123 : vector<16x48xf32>
    %125 = arith.mulf %124, %114 : vector<16x48xf32>
    %cst_57 = arith.constant 0.254829586 : f32
    %126 = vector.broadcast %cst_57 : f32 to vector<16x48xf32>
    %127 = arith.addf %125, %126 : vector<16x48xf32>
    %128 = arith.mulf %127, %114 : vector<16x48xf32>
    %cst_58 = arith.constant 0.000000e+00 : f32
    %129 = vector.broadcast %cst_58 : f32 to vector<16x48xf32>
    %130 = arith.subf %129, %108 : vector<16x48xf32>
    %131 = arith.mulf %130, %108 : vector<16x48xf32>
    %132 = math.exp %131 : vector<16x48xf32>
    %133 = arith.mulf %128, %132 : vector<16x48xf32>
    %cst_59 = arith.constant 1.000000e+00 : f32
    %134 = vector.broadcast %cst_59 : f32 to vector<16x48xf32>
    %135 = arith.subf %134, %133 : vector<16x48xf32>
    %136 = arith.mulf %107, %135 : vector<16x48xf32>
    %cst_60 = arith.constant 1.000000e+00 : f32
    %137 = vector.broadcast %cst_60 : f32 to vector<16x48xf32>
    %138 = arith.addf %137, %136 : vector<16x48xf32>
    %139 = arith.mulf %100, %138 : vector<16x48xf32>
    %140 = arith.truncf %139 : vector<16x48xf32> to vector<16x48xbf16>
    %c0_61 = arith.constant 0 : index
    %c0_62 = arith.constant 0 : index
    %141 = vector.load %arg13[%c0_61, %c0_62] : memref<48x128xbf16, #tpu.memory_space<vmem>>, vector<48x128xbf16>
    %cst_63 = arith.constant dense<0.000000e+00> : vector<16x128xf32>
    %142 = tpu.matmul %140, %141, %cst_63 {dimension_numbers = #tpu.dot_dimension_numbers<[1], [0], [0], [1], [0, 0, 1, 1], [], []>} : vector<16x48xbf16>, vector<48x128xbf16>, vector<16x128xf32> -> vector<16x128xf32>
    %c0_64 = arith.constant 0 : index
    %c0_65 = arith.constant 0 : index
    %143 = vector.load %arg14[%c0_64, %c0_65] : memref<1x128xf32, #tpu.memory_space<vmem>>, vector<1x128xf32>
    %144 = vector.broadcast %143 : vector<1x128xf32> to vector<16x128xf32>
    %145 = arith.addf %142, %144 : vector<16x128xf32>
    %146 = arith.addf %68, %145 : vector<16x128xf32>
    %147 = vector.shape_cast %146 : vector<16x128xf32> to vector<2x8x128xf32>
    %c0_66 = arith.constant 0 : index
    %c0_67 = arith.constant 0 : index
    %c0_68 = arith.constant 0 : index
    %148 = vector.load %arg15[%c0_66, %c0_67, %c0_68] : memref<2x8x128xf32, #tpu.memory_space<vmem>>, vector<2x8x128xf32>
    tpu.vector_store %arg15[%c0_66, %c0_67, %c0_68], %147 {strides = array<i32>} : memref<2x8x128xf32, #tpu.memory_space<vmem>>, vector<2x8x128xf32>,
    return
  }
  func.func @transform_0(%arg0: i32) -> (i32, i32, i32) {
    %c0_i32 = arith.constant 0 : i32
    %c0_i32_0 = arith.constant 0 : i32
    %c0_i32_1 = arith.constant 0 : i32
    return %arg0, %c0_i32, %c0_i32_0 : i32, i32, i32
  }
  func.func @transform_1(%arg0: i32) -> (i32, i32, i32) {
    %c0_i32 = arith.constant 0 : i32
    %c0_i32_0 = arith.constant 0 : i32
    %c0_i32_1 = arith.constant 0 : i32
    return %arg0, %c0_i32, %c0_i32_0 : i32, i32, i32
  }
  func.func @transform_2(%arg0: i32) -> (i32, i32, i32) {
    %c0_i32 = arith.constant 0 : i32
    %c0_i32_0 = arith.constant 0 : i32
    %c0_i32_1 = arith.constant 0 : i32
    return %arg0, %c0_i32, %c0_i32_0 : i32, i32, i32
  }
  func.func @transform_3(%arg0: i32) -> (i32, i32) {
    %c0_i32 = arith.constant 0 : i32
    %c0_i32_0 = arith.constant 0 : i32
    %c0_i32_1 = arith.constant 0 : i32
    return %c0_i32, %c0_i32_0 : i32, i32
  }
  func.func @transform_4(%arg0: i32) -> (i32, i32) {
    %c0_i32 = arith.constant 0 : i32
    %c0_i32_0 = arith.constant 0 : i32
    %c0_i32_1 = arith.constant 0 : i32
    return %c0_i32, %c0_i32_0 : i32, i32
  }
  func.func @transform_5(%arg0: i32) -> (i32, i32) {
    %c0_i32 = arith.constant 0 : i32
    %c0_i32_0 = arith.constant 0 : i32
    %c0_i32_1 = arith.constant 0 : i32
    return %c0_i32, %c0_i32_0 : i32, i32
  }
  func.func @transform_6(%arg0: i32) -> (i32, i32) {
    %c0_i32 = arith.constant 0 : i32
    %c0_i32_0 = arith.constant 0 : i32
    %c0_i32_1 = arith.constant 0 : i32
    return %c0_i32, %c0_i32_0 : i32, i32
  }
  func.func @transform_7(%arg0: i32) -> (i32, i32) {
    %c0_i32 = arith.constant 0 : i32
    %c0_i32_0 = arith.constant 0 : i32
    %c0_i32_1 = arith.constant 0 : i32
    return %c0_i32, %c0_i32_0 : i32, i32
  }
  func.func @transform_8(%arg0: i32) -> (i32, i32) {
    %c0_i32 = arith.constant 0 : i32
    %c0_i32_0 = arith.constant 0 : i32
    %c0_i32_1 = arith.constant 0 : i32
    return %c0_i32, %c0_i32_0 : i32, i32
  }
  func.func @transform_9(%arg0: i32) -> (i32, i32) {
    %c0_i32 = arith.constant 0 : i32
    %c0_i32_0 = arith.constant 0 : i32
    %c0_i32_1 = arith.constant 0 : i32
    return %c0_i32, %c0_i32_0 : i32, i32
  }
  func.func @transform_10(%arg0: i32) -> (i32, i32) {
    %c0_i32 = arith.constant 0 : i32
    %c0_i32_0 = arith.constant 0 : i32
    %c0_i32_1 = arith.constant 0 : i32
    return %c0_i32, %c0_i32_0 : i32, i32
  }
  func.func @transform_11(%arg0: i32) -> (i32, i32) {
    %c0_i32 = arith.constant 0 : i32
    %c0_i32_0 = arith.constant 0 : i32
    %c0_i32_1 = arith.constant 0 : i32
    return %c0_i32, %c0_i32_0 : i32, i32
  }
  func.func @transform_12(%arg0: i32) -> (i32, i32) {
    %c0_i32 = arith.constant 0 : i32
    %c0_i32_0 = arith.constant 0 : i32
    %c0_i32_1 = arith.constant 0 : i32
    return %c0_i32, %c0_i32_0 : i32, i32
  }
  func.func @transform_13(%arg0: i32) -> (i32, i32) {
    %c0_i32 = arith.constant 0 : i32
    %c0_i32_0 = arith.constant 0 : i32
    %c0_i32_1 = arith.constant 0 : i32
    return %c0_i32, %c0_i32_0 : i32, i32
  }
  func.func @transform_14(%arg0: i32) -> (i32, i32, i32) {
    %c0_i32 = arith.constant 0 : i32
    %c0_i32_0 = arith.constant 0 : i32
    %c0_i32_1 = arith.constant 0 : i32
    return %arg0, %c0_i32, %c0_i32_0 : i32, i32, i32
  }
}

</mosaic_0001>

<llo_original>
// kernel: cross_channel_transformer_encoder_layer.1
$region0: #{cross_channel_transformer_encoder_layer.1}
  #allocation0 [shape = 'u32[]', space=smem, size = 0x4, offset = 0x4, fixed_abs, tag = 'smem constant byte address 0x4 - core index']
  #allocation1 [shape = 'u32[144,128]{1,0:T(1,128)}', space=vmem, size = 0x12000, scoped, tag = 'internal scratch']
  %s0 = inlined_call_operand.vmem [shape: bf16[2,8,128], index: 0, kind: input, shape index: {}]
  %s1 = inlined_call_operand.vmem [shape: bf16[2,8,64], index: 1, kind: input, shape index: {}]
  %s2 = inlined_call_operand.vmem [shape: bf16[2,8,32], index: 2, kind: input, shape index: {}]
  %s3 = inlined_call_operand.vmem [shape: bf16[128,32], index: 3, kind: input, shape index: {}]
  %s4 = inlined_call_operand.vmem [shape: bf16[64,64], index: 4, kind: input, shape index: {}]
  %s5 = inlined_call_operand.vmem [shape: bf16[32,64], index: 5, kind: input, shape index: {}]
  %s6 = inlined_call_operand.vmem [shape: bf16[32,128], index: 6, kind: input, shape index: {}]
  %s7 = inlined_call_operand.vmem [shape: f32[1,128], index: 7, kind: input, shape index: {}]
  %s8 = inlined_call_operand.vmem [shape: f32[1,128], index: 8, kind: input, shape index: {}]
  %s9 = inlined_call_operand.vmem [shape: f32[1,128], index: 9, kind: input, shape index: {}]
  %s10 = inlined_call_operand.vmem [shape: bf16[128,48], index: 10, kind: input, shape index: {}]
  %s11 = inlined_call_operand.vmem [shape: f32[1,48], index: 11, kind: input, shape index: {}]
  %s12 = inlined_call_operand.vmem [shape: bf16[48,128], index: 12, kind: input, shape index: {}]
  %s13 = inlined_call_operand.vmem [shape: f32[1,128], index: 13, kind: input, shape index: {}]
  %s14 = inlined_call_operand.hbm [shape: f32[2,8,128], index: 14, kind: output, shape index: {}]
  %s15 = sld [smem:[#allocation0]]
  $region66: #{cross_channel_transformer_encoder_layer.1} parent=0
    _
  %s17 = ssub.s32 1, %s15
  %s18 = scalar_select 0, %s17, %s15
  $region1: #{cross_channel_transformer_encoder_layer.1} parent=0
    #allocation2 [shape = 'u8[8192]{0}', space=vmem, size = 0x2000, scoped, tag = 'output window, operand 0, single buffered']
    #allocation3 [shape = 's32[1]{0}', space=sflag, size = 0x4, scoped, tag = 'scoped memory for cross_channel_transformer_encoder_layer.1']
    %19 = vsyncpa [#allocation3], 0
    // Predicated region
    $region2: #{cross_channel_transformer_encoder_layer.1} parent=1 // pred_check
      _
    $region3: #{cross_channel_transformer_encoder_layer.1} parent=1 // pred_check_branch
      %21 = sbr.rel (0) target = $region5
    $region4: #{cross_channel_transformer_encoder_layer.1} parent=1 // pred_region
      _
    $region5: #{cross_channel_transformer_encoder_layer.1} parent=1 // pred_fallthru
      _
    // Predicated region
    $region6: #{cross_channel_transformer_encoder_layer.1} parent=1 // pred_check
      _
    $region7: #{cross_channel_transformer_encoder_layer.1} parent=1 // pred_check_branch
      %23 = sbr.rel (0) target = $region9
    $region8: #{cross_channel_transformer_encoder_layer.1} parent=1 // pred_region
      _
    $region9: #{cross_channel_transformer_encoder_layer.1} parent=1 // pred_fallthru
      _
    // Predicated region
    $region10: #{cross_channel_transformer_encoder_layer.1} parent=1 // pred_check
      _
    $region11: #{cross_channel_transformer_encoder_layer.1} parent=1 // pred_check_branch
      %25 = sbr.rel (0) target = $region13
    $region12: #{cross_channel_transformer_encoder_layer.1} parent=1 // pred_region
      _
    $region13: #{cross_channel_transformer_encoder_layer.1} parent=1 // pred_fallthru
      _
    // Predicated region
    $region14: #{cross_channel_transformer_encoder_layer.1} parent=1 // pred_check
      _
    $region15: #{cross_channel_transformer_encoder_layer.1} parent=1 // pred_check_branch
      %27 = sbr.rel (0) target = $region17
    $region16: #{cross_channel_transformer_encoder_layer.1} parent=1 // pred_region
      _
    $region17: #{cross_channel_transformer_encoder_layer.1} parent=1 // pred_fallthru
      _
    // Predicated region
    $region18: #{cross_channel_transformer_encoder_layer.1} parent=1 // pred_check
      _
    $region19: #{cross_channel_transformer_encoder_layer.1} parent=1 // pred_check_branch
      %29 = sbr.rel (0) target = $region21
    $region20: #{cross_channel_transformer_encoder_layer.1} parent=1 // pred_region
      _
    $region21: #{cross_channel_transformer_encoder_layer.1} parent=1 // pred_fallthru
      _
    // Predicated region
    $region22: #{cross_channel_transformer_encoder_layer.1} parent=1 // pred_check
      _
    $region23: #{cross_channel_transformer_encoder_layer.1} parent=1 // pred_check_branch
      %31 = sbr.rel (0) target = $region25
    $region24: #{cross_channel_transformer_encoder_layer.1} parent=1 // pred_region
      _
    $region25: #{cross_channel_transformer_encoder_layer.1} parent=1 // pred_fallthru
      _
    // Predicated region
    $region26: #{cross_channel_transformer_encoder_layer.1} parent=1 // pred_check
      _
    $region27: #{cross_channel_transformer_encoder_layer.1} parent=1 // pred_check_branch
      %33 = sbr.rel (0) target = $region29
    $region28: #{cross_channel_transformer_encoder_layer.1} parent=1 // pred_region
      _
    $region29: #{cross_channel_transformer_encoder_layer.1} parent=1 // pred_fallthru
      _
    // Predicated region
    $region30: #{cross_channel_transformer_encoder_layer.1} parent=1 // pred_check
      _
    $region31: #{cross_channel_transformer_encoder_layer.1} parent=1 // pred_check_branch
      %35 = sbr.rel (0) target = $region33
    $region32: #{cross_channel_transformer_encoder_layer.1} parent=1 // pred_region
      _
    $region33: #{cross_channel_transformer_encoder_layer.1} parent=1 // pred_fallthru
      _
    // Predicated region
    $region34: #{cross_channel_transformer_encoder_layer.1} parent=1 // pred_check
      _
    $region35: #{cross_channel_transformer_encoder_layer.1} parent=1 // pred_check_branch
      %37 = sbr.rel (0) target = $region37
    $region36: #{cross_channel_transformer_encoder_layer.1} parent=1 // pred_region
      _
    $region37: #{cross_channel_transformer_encoder_layer.1} parent=1 // pred_fallthru
      _
    // Predicated region
    $region38: #{cross_channel_transformer_encoder_layer.1} parent=1 // pred_check
      _
    $region39: #{cross_channel_transformer_encoder_layer.1} parent=1 // pred_check_branch
      %39 = sbr.rel (0) target = $region41
    $region40: #{cross_channel_transformer_encoder_layer.1} parent=1 // pred_region
      _
    $region41: #{cross_channel_transformer_encoder_layer.1} parent=1 // pred_fallthru
      _
    // Predicated region
    $region42: #{cross_channel_transformer_encoder_layer.1} parent=1 // pred_check
      _
    $region43: #{cross_channel_transformer_encoder_layer.1} parent=1 // pred_check_branch
      %41 = sbr.rel (0) target = $region45
    $region44: #{cross_channel_transformer_encoder_layer.1} parent=1 // pred_region
      _
    $region45: #{cross_channel_transformer_encoder_layer.1} parent=1 // pred_fallthru
      _
    // Predicated region
    $region46: #{cross_channel_transformer_encoder_layer.1} parent=1 // pred_check
      _
    $region47: #{cross_channel_transformer_encoder_layer.1} parent=1 // pred_check_branch
      %43 = sbr.rel (0) target = $region49
    $region48: #{cross_channel_transformer_encoder_layer.1} parent=1 // pred_region
      _
    $region49: #{cross_channel_transformer_encoder_layer.1} parent=1 // pred_fallthru
      _
    // Predicated region
    $region50: #{cross_channel_transformer_encoder_layer.1} parent=1 // pred_check
      _
    $region51: #{cross_channel_transformer_encoder_layer.1} parent=1 // pred_check_branch
      %45 = sbr.rel (0) target = $region53
    $region52: #{cross_channel_transformer_encoder_layer.1} parent=1 // pred_region
      _
    $region53: #{cross_channel_transformer_encoder_layer.1} parent=1 // pred_fallthru
      _
    // Predicated region
    $region54: #{cross_channel_transformer_encoder_layer.1} parent=1 // pred_check
      _
    $region55: #{cross_channel_transformer_encoder_layer.1} parent=1 // pred_check_branch
      %47 = sbr.rel (0) target = $region57
    $region56: #{cross_channel_transformer_encoder_layer.1} parent=1 // pred_region
      _
    $region57: #{cross_channel_transformer_encoder_layer.1} parent=1 // pred_fallthru
      _
    %v49 = vld [vmem:[%s0] sm:$0xf]
    %v50 = vld [vmem:[%s0 + $0x4] sm:$0xf]
    %v51 = vunpack.c.l.bf16 %v49
    %v52 = vunpack.c.l.bf16 %v50
    %v53 = vld [vmem:[%s3] sm:$0xf]
    %v54 = vld [vmem:[%s3 + $0x4] sm:$0xf]
    %v55 = vld [vmem:[%s3 + $0x8] sm:$0xf]
    %v56 = vld [vmem:[%s3 + $0xc] sm:$0xf]
    %v57 = vld [vmem:[%s3 + $0x10] sm:$0xf]
    %v58 = vld [vmem:[%s3 + $0x14] sm:$0xf]
    %v59 = vld [vmem:[%s3 + $0x18] sm:$0xf]
    %v60 = vld [vmem:[%s3 + $0x1c] sm:$0xf]
    %v61 = vld [vmem:[%s3 + $0x20] sm:$0xf]
    %v62 = vld [vmem:[%s3 + $0x24] sm:$0xf]
    %v63 = vld [vmem:[%s3 + $0x28] sm:$0xf]
    %v64 = vld [vmem:[%s3 + $0x2c] sm:$0xf]
    %v65 = vld [vmem:[%s3 + $0x30] sm:$0xf]
    %v66 = vld [vmem:[%s3 + $0x34] sm:$0xf]
    %v67 = vld [vmem:[%s3 + $0x38] sm:$0xf]
    %v68 = vld [vmem:[%s3 + $0x3c] sm:$0xf]
    %v71 = vunpack.c.l.b16 %v49
    %v72 = vunpack.c.l.b16 %v50
    %v73 = vpack.c.b16 %v72, %v71
    %v91 = vunpack.c.l.b16 %v53
    %v92 = vunpack.c.l.b16 %v54
    %v93 = vunpack.c.l.b16 %v55
    %v94 = vunpack.c.l.b16 %v56
    %v95 = vunpack.c.l.b16 %v57
    %v96 = vunpack.c.l.b16 %v58
    %v97 = vunpack.c.l.b16 %v59
    %v98 = vunpack.c.l.b16 %v60
    %v99 = vunpack.c.l.b16 %v61
    %v100 = vunpack.c.l.b16 %v62
    %v101 = vunpack.c.l.b16 %v63
    %v102 = vunpack.c.l.b16 %v64
    %v103 = vunpack.c.l.b16 %v65
    %v104 = vunpack.c.l.b16 %v66
    %v105 = vunpack.c.l.b16 %v67
    %v106 = vunpack.c.l.b16 %v68
    %v107 = vpack.c.b16 %v92, %v91
    %v108 = vpack.c.b16 %v94, %v93
    %v109 = vpack.c.b16 %v96, %v95
    %v110 = vpack.c.b16 %v98, %v97
    %v111 = vpack.c.b16 %v100, %v99
    %v112 = vpack.c.b16 %v102, %v101
    %v113 = vpack.c.b16 %v104, %v103
    %v114 = vpack.c.b16 %v106, %v105
    %123 = vmatprep.subr.bf16.mxu0 0
    %124 = vmatpush1.bf16.msra.mxu0 %v107
    %125 = vmatprep.subr.bf16.mxu0 0
    %126 = vmatpush1.bf16.msra.mxu0 %v108
    %127 = vmatprep.subr.bf16.mxu0 0
    %128 = vmatpush1.bf16.msra.mxu0 %v109
    %129 = vmatprep.subr.bf16.mxu0 0
    %130 = vmatpush1.bf16.msra.mxu0 %v110
    %131 = vmatprep.subr.bf16.mxu0 0
    %132 = vmatpush1.bf16.msra.mxu0 %v111
    %133 = vmatprep.subr.bf16.mxu0 0
    %134 = vmatpush1.bf16.msra.mxu0 %v112
    %135 = vmatprep.subr.bf16.mxu0 0
    %136 = vmatpush1.bf16.msra.mxu0 %v113
    %137 = vmatprep.subr.bf16.mxu0 0
    %138 = vmatpush1.bf16.msra.mxu0 %v114
    %139 = vmatprep.subr.bf16.mxu0 0
    %140 = vmatpush1.bf16.msra.mxu0 0
    %141 = vmatprep.subr.bf16.mxu0 0
    %142 = vmatpush1.bf16.msra.mxu0 0
    %143 = vmatprep.subr.bf16.mxu0 0
    %144 = vmatpush1.bf16.msra.mxu0 0
    %145 = vmatprep.subr.bf16.mxu0 0
    %146 = vmatpush1.bf16.msra.mxu0 0
    %147 = vmatprep.subr.bf16.mxu0 0
    %148 = vmatpush1.bf16.msra.mxu0 0
    %149 = vmatprep.subr.bf16.mxu0 0
    %150 = vmatpush1.bf16.msra.mxu0 0
    %151 = vmatprep.subr.bf16.mxu0 0
    %152 = vmatpush1.bf16.msra.mxu0 0
    %153 = vmatprep.subr.bf16.mxu0 0
    %154 = vmatpush1.bf16.msra.mxu0 0
    %155 = vmatprep.mubr.bf16.mxu0 0
    %156 = vmatmul.mubr.bf16.gmra.mrb[0].mxu0 %v73
    %v157 = vpop.f32.mrb[0].mxu0
    %v158 = vadd.f32 0.0, %v157
    %v159 = vpop.f32.mrb[0].mxu0
    %v160 = vpop.f32.mrb[0].mxu0
    %v161 = vadd.f32 0.0, %v160
    %v162 = vpop.f32.mrb[0].mxu0
    %163 = vdwg.mxu0
    %v164 = vpack.c.bf16 %v161, %v158
    %v165 = vld [vmem:[%s1] sm:$0xf]
    %v166 = vld [vmem:[%s1 + $0x4] sm:$0xf]
    %v167 = vld [vmem:[%s4] sm:$0xf]
    %v168 = vld [vmem:[%s4 + $0x4] sm:$0xf]
    %v169 = vld [vmem:[%s4 + $0x8] sm:$0xf]
    %v170 = vld [vmem:[%s4 + $0xc] sm:$0xf]
    %v171 = vld [vmem:[%s4 + $0x10] sm:$0xf]
    %v172 = vld [vmem:[%s4 + $0x14] sm:$0xf]
    %v173 = vld [vmem:[%s4 + $0x18] sm:$0xf]
    %v174 = vld [vmem:[%s4 + $0x1c] sm:$0xf]
    %v175 = vld [vmem:[%s2] sm:$0xf]
    %v176 = vld [vmem:[%s2 + $0x4] sm:$0xf]
    %v177 = vld [vmem:[%s5] sm:$0xf]
    %v178 = vld [vmem:[%s5 + $0x4] sm:$0xf]
    %v179 = vld [vmem:[%s5 + $0x8] sm:$0xf]
    %v180 = vld [vmem:[%s5 + $0xc] sm:$0xf]
    %v183 = vunpack.c.l.b16 %v175
    %v184 = vunpack.c.l.b16 %v176
    %v185 = vpack.c.b16 %v184, %v183
    %v190 = vunpack.c.l.b16 %v177
    %v191 = vunpack.c.l.b16 %v178
    %v192 = vunpack.c.l.b16 %v179
    %v193 = vunpack.c.l.b16 %v180
    %v194 = vpack.c.b16 %v191, %v190
    %v195 = vpack.c.b16 %v193, %v192
    %vm198 = vcmask 261120
    %v200 = vsel %vm198, %v185, 0
    %202 = vmatprep.subr.bf16.mxu0 0
    %203 = vmatpush1.bf16.msra.mxu0 %v194
    %204 = vmatprep.subr.bf16.mxu0 0
    %205 = vmatpush1.bf16.msra.mxu0 %v195
    %206 = vmatprep.subr.bf16.mxu0 0
    %207 = vmatpush1.bf16.msra.mxu0 0
    %208 = vmatprep.subr.bf16.mxu0 0
    %209 = vmatpush1.bf16.msra.mxu0 0
    %210 = vmatprep.subr.bf16.mxu0 0
    %211 = vmatpush1.bf16.msra.mxu0 0
    %212 = vmatprep.subr.bf16.mxu0 0
    %213 = vmatpush1.bf16.msra.mxu0 0
    %214 = vmatprep.subr.bf16.mxu0 0
    %215 = vmatpush1.bf16.msra.mxu0 0
    %216 = vmatprep.subr.bf16.mxu0 0
    %217 = vmatpush1.bf16.msra.mxu0 0
    %218 = vmatprep.subr.bf16.mxu0 0
    %219 = vmatpush1.bf16.msra.mxu0 0
    %220 = vmatprep.subr.bf16.mxu0 0
    %221 = vmatpush1.bf16.msra.mxu0 0
    %222 = vmatprep.subr.bf16.mxu0 0
    %223 = vmatpush1.bf16.msra.mxu0 0
    %224 = vmatprep.subr.bf16.mxu0 0
    %225 = vmatpush1.bf16.msra.mxu0 0
    %226 = vmatprep.subr.bf16.mxu0 0
    %227 = vmatpush1.bf16.msra.mxu0 0
    %228 = vmatprep.subr.bf16.mxu0 0
    %229 = vmatpush1.bf16.msra.mxu0 0
    %230 = vmatprep.subr.bf16.mxu0 0
    %231 = vmatpush1.bf16.msra.mxu0 0
    %232 = vmatprep.subr.bf16.mxu0 0
    %233 = vmatpush1.bf16.msra.mxu0 0
    %234 = vmatprep.mubr.bf16.mxu0 0
    %235 = vmatmul.mubr.bf16.gmra.mrb[0].mxu0 %v200
    %v236 = vpop.f32.mrb[0].mxu0
    %v237 = vadd.f32 0.0, %v236
    %v238 = vpop.f32.mrb[0].mxu0
    %v239 = vpop.f32.mrb[0].mxu0
    %v240 = vadd.f32 0.0, %v239
    %v241 = vpop.f32.mrb[0].mxu0
    %242 = vdwg.mxu0
    %v245 = vunpack.c.l.b16 %v165
    %v246 = vunpack.c.l.b16 %v166
    %v247 = vpack.c.b16 %v246, %v245
    %v256 = vunpack.c.l.b16 %v167
    %v257 = vunpack.c.l.b16 %v168
    %v258 = vunpack.c.l.b16 %v169
    %v259 = vunpack.c.l.b16 %v170
    %v260 = vunpack.c.l.b16 %v171
    %v261 = vunpack.c.l.b16 %v172
    %v262 = vunpack.c.l.b16 %v173
    %v263 = vunpack.c.l.b16 %v174
    %v264 = vpack.c.b16 %v257, %v256
    %v265 = vpack.c.b16 %v259, %v258
    %v266 = vpack.c.b16 %v261, %v260
    %v267 = vpack.c.b16 %v263, %v262
    %vm272 = vcmask 523264
    %v274 = vsel %vm272, %v247, 0
    %276 = vmatprep.subr.bf16.mxu0 0
    %277 = vmatpush1.bf16.msra.mxu0 %v264
    %278 = vmatprep.subr.bf16.mxu0 0
    %279 = vmatpush1.bf16.msra.mxu0 %v265
    %280 = vmatprep.subr.bf16.mxu0 0
    %281 = vmatpush1.bf16.msra.mxu0 %v266
    %282 = vmatprep.subr.bf16.mxu0 0
    %283 = vmatpush1.bf16.msra.mxu0 %v267
    %284 = vmatprep.subr.bf16.mxu0 0
    %285 = vmatpush1.bf16.msra.mxu0 0
    %286 = vmatprep.subr.bf16.mxu0 0
    %287 = vmatpush1.bf16.msra.mxu0 0
    %288 = vmatprep.subr.bf16.mxu0 0
    %289 = vmatpush1.bf16.msra.mxu0 0
    %290 = vmatprep.subr.bf16.mxu0 0
    %291 = vmatpush1.bf16.msra.mxu0 0
    %292 = vmatprep.subr.bf16.mxu0 0
    %293 = vmatpush1.bf16.msra.mxu0 0
    %294 = vmatprep.subr.bf16.mxu0 0
    %295 = vmatpush1.bf16.msra.mxu0 0
    %296 = vmatprep.subr.bf16.mxu0 0
    %297 = vmatpush1.bf16.msra.mxu0 0
    %298 = vmatprep.subr.bf16.mxu0 0
    %299 = vmatpush1.bf16.msra.mxu0 0
    %300 = vmatprep.subr.bf16.mxu0 0
    %301 = vmatpush1.bf16.msra.mxu0 0
    %302 = vmatprep.subr.bf16.mxu0 0
    %303 = vmatpush1.bf16.msra.mxu0 0
    %304 = vmatprep.subr.bf16.mxu0 0
    %305 = vmatpush1.bf16.msra.mxu0 0
    %306 = vmatprep.subr.bf16.mxu0 0
    %307 = vmatpush1.bf16.msra.mxu0 0
    %308 = vmatprep.mubr.bf16.mxu0 0
    %309 = vmatmul.mubr.bf16.gmra.mrb[0].mxu0 %v274
    %v310 = vpop.f32.mrb[0].mxu0
    %v311 = vadd.f32 %v237, %v310
    %v312 = vpop.f32.mrb[0].mxu0
    %v313 = vpop.f32.mrb[0].mxu0
    %v314 = vadd.f32 %v240, %v313
    %v315 = vpop.f32.mrb[0].mxu0
    %316 = vdwg.mxu0
    %v317 = vpack.c.bf16 %v314, %v311
    %v319 = vunpack.c.l.b16 %v164
    %v320 = vunpack.c.h.b16 %v164
    %v321 = vpack.c.b16 %v319, %v319
    %v322 = vpack.c.b16 %v320, %v320
    %v324 = vunpack.c.l.b16 %v317
    %v325 = vunpack.c.h.b16 %v317
    %v326 = vpack.c.b16 %v324, %v324
    %v327 = vpack.c.b16 %v325, %v325
    %vm328 = vcmask 130048
    %v330 = vsel %vm328, %v321, 0
    %v333 = vsel %vm328, %v326, 0
    %335 = vmatprep.subr.bf16.mxu0 0
    %336 = vmatpush1.bf16.xpose.msra.mxu0 %v333
    %337 = vmatprep.subr.bf16.mxu0 0
    %338 = vmatpush1.bf16.xpose.msra.mxu0 0
    %339 = vmatprep.subr.bf16.mxu0 0
    %340 = vmatpush1.bf16.xpose.msra.mxu0 0
    %341 = vmatprep.subr.bf16.mxu0 0
    %342 = vmatpush1.bf16.xpose.msra.mxu0 0
    %343 = vmatprep.subr.bf16.mxu0 0
    %344 = vmatpush1.bf16.xpose.msra.mxu0 0
    %345 = vmatprep.subr.bf16.mxu0 0
    %346 = vmatpush1.bf16.xpose.msra.mxu0 0
    %347 = vmatprep.subr.bf16.mxu0 0
    %348 = vmatpush1.bf16.xpose.msra.mxu0 0
    %349 = vmatprep.subr.bf16.mxu0 0
    %350 = vmatpush1.bf16.xpose.msra.mxu0 0
    %351 = vmatprep.subr.bf16.mxu0 0
    %352 = vmatpush1.bf16.xpose.msra.mxu0 0
    %353 = vmatprep.subr.bf16.mxu0 0
    %354 = vmatpush1.bf16.xpose.msra.mxu0 0
    %355 = vmatprep.subr.bf16.mxu0 0
    %356 = vmatpush1.bf16.xpose.msra.mxu0 0
    %357 = vmatprep.subr.bf16.mxu0 0
    %358 = vmatpush1.bf16.xpose.msra.mxu0 0
    %359 = vmatprep.subr.bf16.mxu0 0
    %360 = vmatpush1.bf16.xpose.msra.mxu0 0
    %361 = vmatprep.subr.bf16.mxu0 0
    %362 = vmatpush1.bf16.xpose.msra.mxu0 0
    %363 = vmatprep.subr.bf16.mxu0 0
    %364 = vmatpush1.bf16.xpose.msra.mxu0 0
    %365 = vmatprep.subr.bf16.mxu0 0
    %366 = vmatpush1.bf16.xpose.msra.mxu0 0
    %367 = vmatprep.mubr.bf16.mxu0 0
    %368 = vmatmul.mubr.bf16.gmra.mrb[0].mxu0 %v330
    %v369 = vpop.f32.mrb[0].mxu0
    %v370 = vadd.f32 0.0, %v369
    %v371 = vpop.f32.mrb[0].mxu0
    %v372 = vpop.f32.mrb[0].mxu0
    %v373 = vpop.f32.mrb[0].mxu0
    %374 = vdwg.mxu0
    %v376 = vsel %vm328, %v322, 0
    %v379 = vsel %vm328, %v327, 0
    %381 = vmatprep.subr.bf16.mxu0 0
    %382 = vmatpush1.bf16.xpose.msra.mxu0 %v379
    %383 = vmatprep.subr.bf16.mxu0 0
    %384 = vmatpush1.bf16.xpose.msra.mxu0 0
    %385 = vmatprep.subr.bf16.mxu0 0
    %386 = vmatpush1.bf16.xpose.msra.mxu0 0
    %387 = vmatprep.subr.bf16.mxu0 0
    %388 = vmatpush1.bf16.xpose.msra.mxu0 0
    %389 = vmatprep.subr.bf16.mxu0 0
    %390 = vmatpush1.bf16.xpose.msra.mxu0 0
    %391 = vmatprep.subr.bf16.mxu0 0
    %392 = vmatpush1.bf16.xpose.msra.mxu0 0
    %393 = vmatprep.subr.bf16.mxu0 0
    %394 = vmatpush1.bf16.xpose.msra.mxu0 0
    %395 = vmatprep.subr.bf16.mxu0 0
    %396 = vmatpush1.bf16.xpose.msra.mxu0 0
    %397 = vmatprep.subr.bf16.mxu0 0
    %398 = vmatpush1.bf16.xpose.msra.mxu0 0
    %399 = vmatprep.subr.bf16.mxu0 0
    %400 = vmatpush1.bf16.xpose.msra.mxu0 0
    %401 = vmatprep.subr.bf16.mxu0 0
    %402 = vmatpush1.bf16.xpose.msra.mxu0 0
    %403 = vmatprep.subr.bf16.mxu0 0
    %404 = vmatpush1.bf16.xpose.msra.mxu0 0
    %405 = vmatprep.subr.bf16.mxu0 0
    %406 = vmatpush1.bf16.xpose.msra.mxu0 0
    %407 = vmatprep.subr.bf16.mxu0 0
    %408 = vmatpush1.bf16.xpose.msra.mxu0 0
    %409 = vmatprep.subr.bf16.mxu0 0
    %410 = vmatpush1.bf16.xpose.msra.mxu0 0
    %411 = vmatprep.subr.bf16.mxu0 0
    %412 = vmatpush1.bf16.xpose.msra.mxu0 0
    %413 = vmatprep.mubr.bf16.mxu0 0
    %414 = vmatmul.mubr.bf16.gmra.mrb[0].mxu0 %v376
    %v415 = vpop.f32.mrb[0].mxu0
    %v416 = vadd.f32 0.0, %v415
    %v417 = vpop.f32.mrb[0].mxu0
    %v418 = vpop.f32.mrb[0].mxu0
    %v419 = vpop.f32.mrb[0].mxu0
    %420 = vdwg.mxu0
    %v421 = vmul.f32 %v370, 0.25
    %v422 = vmul.f32 %v416, 0.25
    %vm423 = vcmask 64512
    %v424 = vsel %vm423, %v421, -inf
    %425 = vmax.xlane.f32.xlu0 %v424
    %v426 = vpop.xlane.xlu0 %425
    %v427 = vsel %vm423, %v422, -inf
    %428 = vmax.xlane.f32.xlu0 %v427
    %v429 = vpop.xlane.xlu0 %428
    %v430 = vsub.f32 %v421, %v426
    %v431 = vsub.f32 %v422, %v429
    %v432 = vmul.f32 %v430, 1.442695
    %v433 = vpow.pop %v432
    %v434 = vmul.f32 %v431, 1.442695
    %v435 = vpow.pop %v434
    %v436 = vsel %vm423, %v433, 0.0
    %437 = vadd.xlane.f32.xlu0 %v436
    %v438 = vpop.xlane.xlu0 %437
    %v439 = vsel %vm423, %v435, 0.0
    %440 = vadd.xlane.f32.xlu0 %v439
    %v441 = vpop.xlane.xlu0 %440
    %v442 = vrcp.pop %v438
    %v443 = vrcp.pop %v441
    %v444 = vmul.f32 %v433, %v442
    %v445 = vmul.f32 %v435, %v443
    %v446 = vpack.c.bf16 %v444, %v444
    %v447 = vpack.c.bf16 %v445, %v445
    %448 = vrot.lane.b32.xlu0 %v326, 96
    %v449 = vpop.permute.xlu0 %448
    %v451 = vsel %vm423, %v446, 0
    %vm453 = vcmask 1043456
    %v455 = vsel %vm453, %v449, 0
    %457 = vmatprep.subr.bf16.mxu0 0
    %458 = vmatpush1.bf16.msra.mxu0 %v455
    %459 = vmatprep.subr.bf16.mxu0 0
    %460 = vmatpush1.bf16.msra.mxu0 0
    %461 = vmatprep.subr.bf16.mxu0 0
    %462 = vmatpush1.bf16.msra.mxu0 0
    %463 = vmatprep.subr.bf16.mxu0 0
    %464 = vmatpush1.bf16.msra.mxu0 0
    %465 = vmatprep.subr.bf16.mxu0 0
    %466 = vmatpush1.bf16.msra.mxu0 0
    %467 = vmatprep.subr.bf16.mxu0 0
    %468 = vmatpush1.bf16.msra.mxu0 0
    %469 = vmatprep.subr.bf16.mxu0 0
    %470 = vmatpush1.bf16.msra.mxu0 0
    %471 = vmatprep.subr.bf16.mxu0 0
    %472 = vmatpush1.bf16.msra.mxu0 0
    %473 = vmatprep.subr.bf16.mxu0 0
    %474 = vmatpush1.bf16.msra.mxu0 0
    %475 = vmatprep.subr.bf16.mxu0 0
    %476 = vmatpush1.bf16.msra.mxu0 0
    %477 = vmatprep.subr.bf16.mxu0 0
    %478 = vmatpush1.bf16.msra.mxu0 0
    %479 = vmatprep.subr.bf16.mxu0 0
    %480 = vmatpush1.bf16.msra.mxu0 0
    %481 = vmatprep.subr.bf16.mxu0 0
    %482 = vmatpush1.bf16.msra.mxu0 0
    %483 = vmatprep.subr.bf16.mxu0 0
    %484 = vmatpush1.bf16.msra.mxu0 0
    %485 = vmatprep.subr.bf16.mxu0 0
    %486 = vmatpush1.bf16.msra.mxu0 0
    %487 = vmatprep.subr.bf16.mxu0 0
    %488 = vmatpush1.bf16.msra.mxu0 0
    %489 = vmatprep.mubr.bf16.mxu0 0
    %490 = vmatmul.mubr.bf16.gmra.mrb[0].mxu0 %v451
    %v491 = vpop.f32.mrb[0].mxu0
    %v492 = vadd.f32 0.0, %v491
    %v493 = vpop.f32.mrb[0].mxu0
    %v494 = vpop.f32.mrb[0].mxu0
    %v495 = vpop.f32.mrb[0].mxu0
    %496 = vdwg.mxu0
    %497 = vrot.lane.b32.xlu0 %v327, 96
    %v498 = vpop.permute.xlu0 %497
    %v500 = vsel %vm423, %v447, 0
    %v503 = vsel %vm453, %v498, 0
    %505 = vmatprep.subr.bf16.mxu0 0
    %506 = vmatpush1.bf16.msra.mxu0 %v503
    %507 = vmatprep.subr.bf16.mxu0 0
    %508 = vmatpush1.bf16.msra.mxu0 0
    %509 = vmatprep.subr.bf16.mxu0 0
    %510 = vmatpush1.bf16.msra.mxu0 0
    %511 = vmatprep.subr.bf16.mxu0 0
    %512 = vmatpush1.bf16.msra.mxu0 0
    %513 = vmatprep.subr.bf16.mxu0 0
    %514 = vmatpush1.bf16.msra.mxu0 0
    %515 = vmatprep.subr.bf16.mxu0 0
    %516 = vmatpush1.bf16.msra.mxu0 0
    %517 = vmatprep.subr.bf16.mxu0 0
    %518 = vmatpush1.bf16.msra.mxu0 0
    %519 = vmatprep.subr.bf16.mxu0 0
    %520 = vmatpush1.bf16.msra.mxu0 0
    %521 = vmatprep.subr.bf16.mxu0 0
    %522 = vmatpush1.bf16.msra.mxu0 0
    %523 = vmatprep.subr.bf16.mxu0 0
    %524 = vmatpush1.bf16.msra.mxu0 0
    %525 = vmatprep.subr.bf16.mxu0 0
    %526 = vmatpush1.bf16.msra.mxu0 0
    %527 = vmatprep.subr.bf16.mxu0 0
    %528 = vmatpush1.bf16.msra.mxu0 0
    %529 = vmatprep.subr.bf16.mxu0 0
    %530 = vmatpush1.bf16.msra.mxu0 0
    %531 = vmatprep.subr.bf16.mxu0 0
    %532 = vmatpush1.bf16.msra.mxu0 0
    %533 = vmatprep.subr.bf16.mxu0 0
    %534 = vmatpush1.bf16.msra.mxu0 0
    %535 = vmatprep.subr.bf16.mxu0 0
    %536 = vmatpush1.bf16.msra.mxu0 0
    %537 = vmatprep.mubr.bf16.mxu0 0
    %538 = vmatmul.mubr.bf16.gmra.mrb[0].mxu0 %v500
    %v539 = vpop.f32.mrb[0].mxu0
    %v540 = vadd.f32 0.0, %v539
    %v541 = vpop.f32.mrb[0].mxu0
    %v542 = vpop.f32.mrb[0].mxu0
    %v543 = vpop.f32.mrb[0].mxu0
    %544 = vdwg.mxu0
    %545 = vrot.lane.b32.xlu0 %v321, 112
    %v546 = vpop.permute.xlu0 %545
    %547 = vrot.lane.b32.xlu0 %v326, 112
    %v548 = vpop.permute.xlu0 %547
    %v550 = vsel %vm328, %v546, 0
    %v553 = vsel %vm328, %v548, 0
    %555 = vmatprep.subr.bf16.mxu0 0
    %556 = vmatpush1.bf16.xpose.msra.mxu0 %v553
    %557 = vmatprep.subr.bf16.mxu0 0
    %558 = vmatpush1.bf16.xpose.msra.mxu0 0
    %559 = vmatprep.subr.bf16.mxu0 0
    %560 = vmatpush1.bf16.xpose.msra.mxu0 0
    %561 = vmatprep.subr.bf16.mxu0 0
    %562 = vmatpush1.bf16.xpose.msra.mxu0 0
    %563 = vmatprep.subr.bf16.mxu0 0
    %564 = vmatpush1.bf16.xpose.msra.mxu0 0
    %565 = vmatprep.subr.bf16.mxu0 0
    %566 = vmatpush1.bf16.xpose.msra.mxu0 0
    %567 = vmatprep.subr.bf16.mxu0 0
    %568 = vmatpush1.bf16.xpose.msra.mxu0 0
    %569 = vmatprep.subr.bf16.mxu0 0
    %570 = vmatpush1.bf16.xpose.msra.mxu0 0
    %571 = vmatprep.subr.bf16.mxu0 0
    %572 = vmatpush1.bf16.xpose.msra.mxu0 0
    %573 = vmatprep.subr.bf16.mxu0 0
    %574 = vmatpush1.bf16.xpose.msra.mxu0 0
    %575 = vmatprep.subr.bf16.mxu0 0
    %576 = vmatpush1.bf16.xpose.msra.mxu0 0
    %577 = vmatprep.subr.bf16.mxu0 0
    %578 = vmatpush1.bf16.xpose.msra.mxu0 0
    %579 = vmatprep.subr.bf16.mxu0 0
    %580 = vmatpush1.bf16.xpose.msra.mxu0 0
    %581 = vmatprep.subr.bf16.mxu0 0
    %582 = vmatpush1.bf16.xpose.msra.mxu0 0
    %583 = vmatprep.subr.bf16.mxu0 0
    %584 = vmatpush1.bf16.xpose.msra.mxu0 0
    %585 = vmatprep.subr.bf16.mxu0 0
    %586 = vmatpush1.bf16.xpose.msra.mxu0 0
    %587 = vmatprep.mubr.bf16.mxu0 0
    %588 = vmatmul.mubr.bf16.gmra.mrb[0].mxu0 %v550
    %v589 = vpop.f32.mrb[0].mxu0
    %v590 = vadd.f32 0.0, %v589
    %v591 = vpop.f32.mrb[0].mxu0
    %v592 = vpop.f32.mrb[0].mxu0
    %v593 = vpop.f32.mrb[0].mxu0
    %594 = vdwg.mxu0
    %595 = vrot.lane.b32.xlu0 %v322, 112
    %v596 = vpop.permute.xlu0 %595
    %597 = vrot.lane.b32.xlu0 %v327, 112
    %v598 = vpop.permute.xlu0 %597
    %v600 = vsel %vm328, %v596, 0
    %v603 = vsel %vm328, %v598, 0
    %605 = vmatprep.subr.bf16.mxu0 0
    %606 = vmatpush1.bf16.xpose.msra.mxu0 %v603
    %607 = vmatprep.subr.bf16.mxu0 0
    %608 = vmatpush1.bf16.xpose.msra.mxu0 0
    %609 = vmatprep.subr.bf16.mxu0 0
    %610 = vmatpush1.bf16.xpose.msra.mxu0 0
    %611 = vmatprep.subr.bf16.mxu0 0
    %612 = vmatpush1.bf16.xpose.msra.mxu0 0
    %613 = vmatprep.subr.bf16.mxu0 0
    %614 = vmatpush1.bf16.xpose.msra.mxu0 0
    %615 = vmatprep.subr.bf16.mxu0 0
    %616 = vmatpush1.bf16.xpose.msra.mxu0 0
    %617 = vmatprep.subr.bf16.mxu0 0
    %618 = vmatpush1.bf16.xpose.msra.mxu0 0
    %619 = vmatprep.subr.bf16.mxu0 0
    %620 = vmatpush1.bf16.xpose.msra.mxu0 0
    %621 = vmatprep.subr.bf16.mxu0 0
    %622 = vmatpush1.bf16.xpose.msra.mxu0 0
    %623 = vmatprep.subr.bf16.mxu0 0
    %624 = vmatpush1.bf16.xpose.msra.mxu0 0
    %625 = vmatprep.subr.bf16.mxu0 0
    %626 = vmatpush1.bf16.xpose.msra.mxu0 0
    %627 = vmatprep.subr.bf16.mxu0 0
    %628 = vmatpush1.bf16.xpose.msra.mxu0 0
    %629 = vmatprep.subr.bf16.mxu0 0
    %630 = vmatpush1.bf16.xpose.msra.mxu0 0
    %631 = vmatprep.subr.bf16.mxu0 0
    %632 = vmatpush1.bf16.xpose.msra.mxu0 0
    %633 = vmatprep.subr.bf16.mxu0 0
    %634 = vmatpush1.bf16.xpose.msra.mxu0 0
    %635 = vmatprep.subr.bf16.mxu0 0
    %636 = vmatpush1.bf16.xpose.msra.mxu0 0
    %637 = vmatprep.mubr.bf16.mxu0 0
    %638 = vmatmul.mubr.bf16.gmra.mrb[0].mxu0 %v600
    %v639 = vpop.f32.mrb[0].mxu0
    %v640 = vadd.f32 0.0, %v639
    %v641 = vpop.f32.mrb[0].mxu0
    %v642 = vpop.f32.mrb[0].mxu0
    %v643 = vpop.f32.mrb[0].mxu0
    %644 = vdwg.mxu0
    %v645 = vmul.f32 %v590, 0.25
    %v646 = vmul.f32 %v640, 0.25
    %v647 = vsel %vm423, %v645, -inf
    %648 = vmax.xlane.f32.xlu0 %v647
    %v649 = vpop.xlane.xlu0 %648
    %v650 = vsel %vm423, %v646, -inf
    %651 = vmax.xlane.f32.xlu0 %v650
    %v652 = vpop.xlane.xlu0 %651
    %v653 = vsub.f32 %v645, %v649
    %v654 = vsub.f32 %v646, %v652
    %v655 = vmul.f32 %v653, 1.442695
    %v656 = vpow.pop %v655
    %v657 = vmul.f32 %v654, 1.442695
    %v658 = vpow.pop %v657
    %v659 = vsel %vm423, %v656, 0.0
    %660 = vadd.xlane.f32.xlu0 %v659
    %v661 = vpop.xlane.xlu0 %660
    %v662 = vsel %vm423, %v658, 0.0
    %663 = vadd.xlane.f32.xlu0 %v662
    %v664 = vpop.xlane.xlu0 %663
    %v665 = vrcp.pop %v661
    %v666 = vrcp.pop %v664
    %v667 = vmul.f32 %v656, %v665
    %v668 = vmul.f32 %v658, %v666
    %v669 = vpack.c.bf16 %v667, %v667
    %v670 = vpack.c.bf16 %v668, %v668
    %671 = vrot.lane.b32.xlu0 %v326, 80
    %v672 = vpop.permute.xlu0 %671
    %v674 = vsel %vm423, %v669, 0
    %v677 = vsel %vm453, %v672, 0
    %679 = vmatprep.subr.bf16.mxu0 0
    %680 = vmatpush1.bf16.msra.mxu0 %v677
    %681 = vmatprep.subr.bf16.mxu0 0
    %682 = vmatpush1.bf16.msra.mxu0 0
    %683 = vmatprep.subr.bf16.mxu0 0
    %684 = vmatpush1.bf16.msra.mxu0 0
    %685 = vmatprep.subr.bf16.mxu0 0
    %686 = vmatpush1.bf16.msra.mxu0 0
    %687 = vmatprep.subr.bf16.mxu0 0
    %688 = vmatpush1.bf16.msra.mxu0 0
    %689 = vmatprep.subr.bf16.mxu0 0
    %690 = vmatpush1.bf16.msra.mxu0 0
    %691 = vmatprep.subr.bf16.mxu0 0
    %692 = vmatpush1.bf16.msra.mxu0 0
    %693 = vmatprep.subr.bf16.mxu0 0
    %694 = vmatpush1.bf16.msra.mxu0 0
    %695 = vmatprep.subr.bf16.mxu0 0
    %696 = vmatpush1.bf16.msra.mxu0 0
    %697 = vmatprep.subr.bf16.mxu0 0
    %698 = vmatpush1.bf16.msra.mxu0 0
    %699 = vmatprep.subr.bf16.mxu0 0
    %700 = vmatpush1.bf16.msra.mxu0 0
    %701 = vmatprep.subr.bf16.mxu0 0
    %702 = vmatpush1.bf16.msra.mxu0 0
    %703 = vmatprep.subr.bf16.mxu0 0
    %704 = vmatpush1.bf16.msra.mxu0 0
    %705 = vmatprep.subr.bf16.mxu0 0
    %706 = vmatpush1.bf16.msra.mxu0 0
    %707 = vmatprep.subr.bf16.mxu0 0
    %708 = vmatpush1.bf16.msra.mxu0 0
    %709 = vmatprep.subr.bf16.mxu0 0
    %710 = vmatpush1.bf16.msra.mxu0 0
    %711 = vmatprep.mubr.bf16.mxu0 0
    %712 = vmatmul.mubr.bf16.gmra.mrb[0].mxu0 %v674
    %v713 = vpop.f32.mrb[0].mxu0
    %v714 = vadd.f32 0.0, %v713
    %v715 = vpop.f32.mrb[0].mxu0
    %v716 = vpop.f32.mrb[0].mxu0
    %v717 = vpop.f32.mrb[0].mxu0
    %718 = vdwg.mxu0
    %719 = vrot.lane.b32.xlu0 %v327, 80
    %v720 = vpop.permute.xlu0 %719
    %v722 = vsel %vm423, %v670, 0
    %v725 = vsel %vm453, %v720, 0
    %727 = vmatprep.subr.bf16.mxu0 0
    %728 = vmatpush1.bf16.msra.mxu0 %v725
    %729 = vmatprep.subr.bf16.mxu0 0
    %730 = vmatpush1.bf16.msra.mxu0 0
    %731 = vmatprep.subr.bf16.mxu0 0
    %732 = vmatpush1.bf16.msra.mxu0 0
    %733 = vmatprep.subr.bf16.mxu0 0
    %734 = vmatpush1.bf16.msra.mxu0 0
    %735 = vmatprep.subr.bf16.mxu0 0
    %736 = vmatpush1.bf16.msra.mxu0 0
    %737 = vmatprep.subr.bf16.mxu0 0
    %738 = vmatpush1.bf16.msra.mxu0 0
    %739 = vmatprep.subr.bf16.mxu0 0
    %740 = vmatpush1.bf16.msra.mxu0 0
    %741 = vmatprep.subr.bf16.mxu0 0
    %742 = vmatpush1.bf16.msra.mxu0 0
    %743 = vmatprep.subr.bf16.mxu0 0
    %744 = vmatpush1.bf16.msra.mxu0 0
    %745 = vmatprep.subr.bf16.mxu0 0
    %746 = vmatpush1.bf16.msra.mxu0 0
    %747 = vmatprep.subr.bf16.mxu0 0
    %748 = vmatpush1.bf16.msra.mxu0 0
    %749 = vmatprep.subr.bf16.mxu0 0
    %750 = vmatpush1.bf16.msra.mxu0 0
    %751 = vmatprep.subr.bf16.mxu0 0
    %752 = vmatpush1.bf16.msra.mxu0 0
    %753 = vmatprep.subr.bf16.mxu0 0
    %754 = vmatpush1.bf16.msra.mxu0 0
    %755 = vmatprep.subr.bf16.mxu0 0
    %756 = vmatpush1.bf16.msra.mxu0 0
    %757 = vmatprep.subr.bf16.mxu0 0
    %758 = vmatpush1.bf16.msra.mxu0 0
    %759 = vmatprep.mubr.bf16.mxu0 0
    %760 = vmatmul.mubr.bf16.gmra.mrb[0].mxu0 %v722
    %v761 = vpop.f32.mrb[0].mxu0
    %v762 = vadd.f32 0.0, %v761
    %v763 = vpop.f32.mrb[0].mxu0
    %v764 = vpop.f32.mrb[0].mxu0
    %v765 = vpop.f32.mrb[0].mxu0
    %766 = vdwg.mxu0
    %769 = vrot.lane.b32.xlu0 %v714, 16
    %v770 = vpop.permute.xlu0 %769
    %771 = vrot.lane.b32.xlu0 %v762, 16
    %v772 = vpop.permute.xlu0 %771
    %v775 = vsel %vm328, %v492, %v770
    %v776 = vsel %vm328, %v540, %v772
    %v777 = vpack.c.bf16 %v776, %v775
    %v778 = vld [vmem:[%s6] sm:$0xf]
    %v779 = vld [vmem:[%s6 + $0x4] sm:$0xf]
    %v780 = vld [vmem:[%s6 + $0x8] sm:$0xf]
    %v781 = vld [vmem:[%s6 + $0xc] sm:$0xf]
    %v782 = vld [vmem:[%s7] sm:$0x1]
    %v784 = vlaneseq
    %v785 = vshrl.u32 %v784, 7
    %v786 = vsub.s32 0, %v785
    %v787 = vrot.slane %v782, %v786
    %v793 = vunpack.c.l.b16 %v778
    %v794 = vunpack.c.l.b16 %v779
    %v795 = vunpack.c.l.b16 %v780
    %v796 = vunpack.c.l.b16 %v781
    %v797 = vpack.c.b16 %v794, %v793
    %v798 = vpack.c.b16 %v796, %v795
    %v802 = vsel %vm198, %v777, 0
    %804 = vmatprep.subr.bf16.mxu0 0
    %805 = vmatpush1.bf16.msra.mxu0 %v797
    %806 = vmatprep.subr.bf16.mxu0 0
    %807 = vmatpush1.bf16.msra.mxu0 %v798
    %808 = vmatprep.subr.bf16.mxu0 0
    %809 = vmatpush1.bf16.msra.mxu0 0
    %810 = vmatprep.subr.bf16.mxu0 0
    %811 = vmatpush1.bf16.msra.mxu0 0
    %812 = vmatprep.subr.bf16.mxu0 0
    %813 = vmatpush1.bf16.msra.mxu0 0
    %814 = vmatprep.subr.bf16.mxu0 0
    %815 = vmatpush1.bf16.msra.mxu0 0
    %816 = vmatprep.subr.bf16.mxu0 0
    %817 = vmatpush1.bf16.msra.mxu0 0
    %818 = vmatprep.subr.bf16.mxu0 0
    %819 = vmatpush1.bf16.msra.mxu0 0
    %820 = vmatprep.subr.bf16.mxu0 0
    %821 = vmatpush1.bf16.msra.mxu0 0
    %822 = vmatprep.subr.bf16.mxu0 0
    %823 = vmatpush1.bf16.msra.mxu0 0
    %824 = vmatprep.subr.bf16.mxu0 0
    %825 = vmatpush1.bf16.msra.mxu0 0
    %826 = vmatprep.subr.bf16.mxu0 0
    %827 = vmatpush1.bf16.msra.mxu0 0
    %828 = vmatprep.subr.bf16.mxu0 0
    %829 = vmatpush1.bf16.msra.mxu0 0
    %830 = vmatprep.subr.bf16.mxu0 0
    %831 = vmatpush1.bf16.msra.mxu0 0
    %832 = vmatprep.subr.bf16.mxu0 0
    %833 = vmatpush1.bf16.msra.mxu0 0
    %834 = vmatprep.subr.bf16.mxu0 0
    %835 = vmatpush1.bf16.msra.mxu0 0
    %836 = vmatprep.mubr.bf16.mxu0 0
    %837 = vmatmul.mubr.bf16.gmra.mrb[0].mxu0 %v802
    %v838 = vpop.f32.mrb[0].mxu0
    %v839 = vadd.f32 %v787, %v838
    %v840 = vpop.f32.mrb[0].mxu0
    %v841 = vpop.f32.mrb[0].mxu0
    %v842 = vadd.f32 %v787, %v841
    %v843 = vpop.f32.mrb[0].mxu0
    %844 = vdwg.mxu0
    %v845 = vadd.f32 %v51, %v839
    %v846 = vadd.f32 %v52, %v842
    %847 = vadd.xlane.f32.xlu0 %v845
    %v848 = vpop.xlane.xlu0 %847
    %849 = vadd.xlane.f32.xlu0 %v846
    %v850 = vpop.xlane.xlu0 %849
    %v851 = vrcp.pop 128.0
    %v852 = vmul.f32 %v848, %v851
    %v853 = vmul.f32 %v850, %v851
    %v854 = vsub.f32 %v845, %v852
    %v855 = vsub.f32 %v846, %v853
    %v856 = vmul.f32 %v854, %v854
    %v857 = vmul.f32 %v855, %v855
    %858 = vadd.xlane.f32.xlu0 %v856
    %v859 = vpop.xlane.xlu0 %858
    %860 = vadd.xlane.f32.xlu0 %v857
    %v861 = vpop.xlane.xlu0 %860
    %v862 = vmul.f32 %v859, %v851
    %v863 = vmul.f32 %v861, %v851
    %v864 = vadd.f32 %v862, 1e-05
    %v865 = vadd.f32 %v863, 1e-05
    %v866 = vrsqrt.pop %v864
    %v867 = vrsqrt.pop %v865
    %v868 = vmul.f32 %v854, %v866
    %v869 = vmul.f32 %v855, %v867
    %v870 = vld [vmem:[%s8] sm:$0x1]
    %v872 = vlaneseq
    %v873 = vshrl.u32 %v872, 7
    %v874 = vsub.s32 0, %v873
    %v875 = vrot.slane %v870, %v874
    %v877 = vmul.f32 %v868, %v875
    %v878 = vmul.f32 %v869, %v875
    %v879 = vld [vmem:[%s9] sm:$0x1]
    %v881 = vlaneseq
    %v882 = vshrl.u32 %v881, 7
    %v883 = vsub.s32 0, %v882
    %v884 = vrot.slane %v879, %v883
    %v886 = vadd.f32 %v877, %v884
    %v887 = vadd.f32 %v878, %v884
    %v888 = vpack.c.bf16 %v887, %v886
    %v889 = vld [vmem:[%s10] sm:$0xf]
    %v890 = vld [vmem:[%s10 + $0x4] sm:$0xf]
    %v891 = vld [vmem:[%s10 + $0x8] sm:$0xf]
    %v892 = vld [vmem:[%s10 + $0xc] sm:$0xf]
    %v893 = vld [vmem:[%s10 + $0x10] sm:$0xf]
    %v894 = vld [vmem:[%s10 + $0x14] sm:$0xf]
    %v895 = vld [vmem:[%s10 + $0x18] sm:$0xf]
    %v896 = vld [vmem:[%s10 + $0x1c] sm:$0xf]
    %v897 = vld [vmem:[%s10 + $0x20] sm:$0xf]
    %v898 = vld [vmem:[%s10 + $0x24] sm:$0xf]
    %v899 = vld [vmem:[%s10 + $0x28] sm:$0xf]
    %v900 = vld [vmem:[%s10 + $0x2c] sm:$0xf]
    %v901 = vld [vmem:[%s10 + $0x30] sm:$0xf]
    %v902 = vld [vmem:[%s10 + $0x34] sm:$0xf]
    %v903 = vld [vmem:[%s10 + $0x38] sm:$0xf]
    %v904 = vld [vmem:[%s10 + $0x3c] sm:$0xf]
    %v905 = vld [vmem:[%s11] sm:$0x1]
    %v907 = vlaneseq
    %v908 = vshrl.u32 %v907, 7
    %v909 = vsub.s32 0, %v908
    %v910 = vrot.slane %v905, %v909
    %v928 = vunpack.c.l.b16 %v889
    %v929 = vunpack.c.l.b16 %v890
    %v930 = vunpack.c.l.b16 %v891
    %v931 = vunpack.c.l.b16 %v892
    %v932 = vunpack.c.l.b16 %v893
    %v933 = vunpack.c.l.b16 %v894
    %v934 = vunpack.c.l.b16 %v895
    %v935 = vunpack.c.l.b16 %v896
    %v936 = vunpack.c.l.b16 %v897
    %v937 = vunpack.c.l.b16 %v898
    %v938 = vunpack.c.l.b16 %v899
    %v939 = vunpack.c.l.b16 %v900
    %v940 = vunpack.c.l.b16 %v901
    %v941 = vunpack.c.l.b16 %v902
    %v942 = vunpack.c.l.b16 %v903
    %v943 = vunpack.c.l.b16 %v904
    %v944 = vpack.c.b16 %v929, %v928
    %v945 = vpack.c.b16 %v931, %v930
    %v946 = vpack.c.b16 %v933, %v932
    %v947 = vpack.c.b16 %v935, %v934
    %v948 = vpack.c.b16 %v937, %v936
    %v949 = vpack.c.b16 %v939, %v938
    %v950 = vpack.c.b16 %v941, %v940
    %v951 = vpack.c.b16 %v943, %v942
    %960 = vmatprep.subr.bf16.mxu0 0
    %961 = vmatpush1.bf16.msra.mxu0 %v944
    %962 = vmatprep.subr.bf16.mxu0 0
    %963 = vmatpush1.bf16.msra.mxu0 %v945
    %964 = vmatprep.subr.bf16.mxu0 0
    %965 = vmatpush1.bf16.msra.mxu0 %v946
    %966 = vmatprep.subr.bf16.mxu0 0
    %967 = vmatpush1.bf16.msra.mxu0 %v947
    %968 = vmatprep.subr.bf16.mxu0 0
    %969 = vmatpush1.bf16.msra.mxu0 %v948
    %970 = vmatprep.subr.bf16.mxu0 0
    %971 = vmatpush1.bf16.msra.mxu0 %v949
    %972 = vmatprep.subr.bf16.mxu0 0
    %973 = vmatpush1.bf16.msra.mxu0 %v950
    %974 = vmatprep.subr.bf16.mxu0 0
    %975 = vmatpush1.bf16.msra.mxu0 %v951
    %976 = vmatprep.subr.bf16.mxu0 0
    %977 = vmatpush1.bf16.msra.mxu0 0
    %978 = vmatprep.subr.bf16.mxu0 0
    %979 = vmatpush1.bf16.msra.mxu0 0
    %980 = vmatprep.subr.bf16.mxu0 0
    %981 = vmatpush1.bf16.msra.mxu0 0
    %982 = vmatprep.subr.bf16.mxu0 0
    %983 = vmatpush1.bf16.msra.mxu0 0
    %984 = vmatprep.subr.bf16.mxu0 0
    %985 = vmatpush1.bf16.msra.mxu0 0
    %986 = vmatprep.subr.bf16.mxu0 0
    %987 = vmatpush1.bf16.msra.mxu0 0
    %988 = vmatprep.subr.bf16.mxu0 0
    %989 = vmatpush1.bf16.msra.mxu0 0
    %990 = vmatprep.subr.bf16.mxu0 0
    %991 = vmatpush1.bf16.msra.mxu0 0
    %992 = vmatprep.mubr.bf16.mxu0 0
    %993 = vmatmul.mubr.bf16.gmra.mrb[0].mxu0 %v888
    %v994 = vpop.f32.mrb[0].mxu0
    %v995 = vadd.f32 %v910, %v994
    %v996 = vpop.f32.mrb[0].mxu0
    %v997 = vpop.f32.mrb[0].mxu0
    %v998 = vadd.f32 %v910, %v997
    %v999 = vpop.f32.mrb[0].mxu0
    %1000 = vdwg.mxu0
    %v1001 = vmul.f32 %v995, 0.5
    %v1002 = vmul.f32 %v998, 0.5
    %v1003 = vmul.f32 %v995, 0.70710677
    %v1004 = vmul.f32 %v998, 0.70710677
    %vm1005 = vcmp.lt.f32.partialorder %v1003, 0.0
    %vm1006 = vcmp.lt.f32.partialorder %v1004, 0.0
    %v1007 = vsel %vm1005, -1.0, 1.0
    %v1008 = vsel %vm1006, -1.0, 1.0
    %v1009 = vand.u32 2147483647, %v1003
    %v1010 = vand.u32 2147483647, %v1004
    %v1011 = vmul.f32 %v1009, 0.3275911
    %v1012 = vmul.f32 %v1010, 0.3275911
    %v1013 = vadd.f32 %v1011, 1.0
    %v1014 = vadd.f32 %v1012, 1.0
    %v1015 = vrcp.pop %v1013
    %v1016 = vmul.f32 1.0, %v1015
    %v1017 = vrcp.pop %v1014
    %v1018 = vmul.f32 1.0, %v1017
    %v1019 = vmul.f32 %v1016, 1.0614054
    %v1020 = vmul.f32 %v1018, 1.0614054
    %v1021 = vadd.f32 %v1019, -1.4531521
    %v1022 = vadd.f32 %v1020, -1.4531521
    %v1023 = vmul.f32 %v1021, %v1016
    %v1024 = vmul.f32 %v1022, %v1018
    %v1025 = vadd.f32 %v1023, 1.4214138
    %v1026 = vadd.f32 %v1024, 1.4214138
    %v1027 = vmul.f32 %v1025, %v1016
    %v1028 = vmul.f32 %v1026, %v1018
    %v1029 = vadd.f32 %v1027, -0.28449672
    %v1030 = vadd.f32 %v1028, -0.28449672
    %v1031 = vmul.f32 %v1029, %v1016
    %v1032 = vmul.f32 %v1030, %v1018
    %v1033 = vadd.f32 %v1031, 0.2548296
    %v1034 = vadd.f32 %v1032, 0.2548296
    %v1035 = vmul.f32 %v1033, %v1016
    %v1036 = vmul.f32 %v1034, %v1018
    %v1037 = vsub.f32 0.0, %v1009
    %v1038 = vsub.f32 0.0, %v1010
    %v1039 = vmul.f32 %v1037, %v1009
    %v1040 = vmul.f32 %v1038, %v1010
    %v1041 = vmul.f32 %v1039, 1.442695
    %v1042 = vpow.pop %v1041
    %v1043 = vmul.f32 %v1040, 1.442695
    %v1044 = vpow.pop %v1043
    %v1045 = vmul.f32 %v1035, %v1042
    %v1046 = vmul.f32 %v1036, %v1044
    %v1047 = vsub.f32 1.0, %v1045
    %v1048 = vsub.f32 1.0, %v1046
    %v1049 = vmul.f32 %v1007, %v1047
    %v1050 = vmul.f32 %v1008, %v1048
    %v1051 = vadd.f32 %v1049, 1.0
    %v1052 = vadd.f32 %v1050, 1.0
    %v1053 = vmul.f32 %v1001, %v1051
    %v1054 = vmul.f32 %v1002, %v1052
    %v1055 = vpack.c.bf16 %v1054, %v1053
    %v1056 = vld [vmem:[%s12] sm:$0xf]
    %v1057 = vld [vmem:[%s12 + $0x4] sm:$0xf]
    %v1058 = vld [vmem:[%s12 + $0x8] sm:$0xf]
    %v1059 = vld [vmem:[%s12 + $0xc] sm:$0xf]
    %v1060 = vld [vmem:[%s12 + $0x10] sm:$0xf]
    %v1061 = vld [vmem:[%s12 + $0x14] sm:$0xf]
    %v1062 = vld [vmem:[%s13] sm:$0x1]
    %v1064 = vlaneseq
    %v1065 = vshrl.u32 %v1064, 7
    %v1066 = vsub.s32 0, %v1065
    %v1067 = vrot.slane %v1062, %v1066
    %v1075 = vunpack.c.l.b16 %v1056
    %v1076 = vunpack.c.l.b16 %v1057
    %v1077 = vunpack.c.l.b16 %v1058
    %v1078 = vunpack.c.l.b16 %v1059
    %v1079 = vunpack.c.l.b16 %v1060
    %v1080 = vunpack.c.l.b16 %v1061
    %v1081 = vpack.c.b16 %v1076, %v1075
    %v1082 = vpack.c.b16 %v1078, %v1077
    %v1083 = vpack.c.b16 %v1080, %v1079
    %vm1087 = vcmask 392192
    %v1089 = vsel %vm1087, %v1055, 0
    %1091 = vmatprep.subr.bf16.mxu0 0
    %1092 = vmatpush1.bf16.msra.mxu0 %v1081
    %1093 = vmatprep.subr.bf16.mxu0 0
    %1094 = vmatpush1.bf16.msra.mxu0 %v1082
    %1095 = vmatprep.subr.bf16.mxu0 0
    %1096 = vmatpush1.bf16.msra.mxu0 %v1083
    %1097 = vmatprep.subr.bf16.mxu0 0
    %1098 = vmatpush1.bf16.msra.mxu0 0
    %1099 = vmatprep.subr.bf16.mxu0 0
    %1100 = vmatpush1.bf16.msra.mxu0 0
    %1101 = vmatprep.subr.bf16.mxu0 0
    %1102 = vmatpush1.bf16.msra.mxu0 0
    %1103 = vmatprep.subr.bf16.mxu0 0
    %1104 = vmatpush1.bf16.msra.mxu0 0
    %1105 = vmatprep.subr.bf16.mxu0 0
    %1106 = vmatpush1.bf16.msra.mxu0 0
    %1107 = vmatprep.subr.bf16.mxu0 0
    %1108 = vmatpush1.bf16.msra.mxu0 0
    %1109 = vmatprep.subr.bf16.mxu0 0
    %1110 = vmatpush1.bf16.msra.mxu0 0
    %1111 = vmatprep.subr.bf16.mxu0 0
    %1112 = vmatpush1.bf16.msra.mxu0 0
    %1113 = vmatprep.subr.bf16.mxu0 0
    %1114 = vmatpush1.bf16.msra.mxu0 0
    %1115 = vmatprep.subr.bf16.mxu0 0
    %1116 = vmatpush1.bf16.msra.mxu0 0
    %1117 = vmatprep.subr.bf16.mxu0 0
    %1118 = vmatpush1.bf16.msra.mxu0 0
    %1119 = vmatprep.subr.bf16.mxu0 0
    %1120 = vmatpush1.bf16.msra.mxu0 0
    %1121 = vmatprep.subr.bf16.mxu0 0
    %1122 = vmatpush1.bf16.msra.mxu0 0
    %1123 = vmatprep.mubr.bf16.mxu0 0
    %1124 = vmatmul.mubr.bf16.gmra.mrb[0].mxu0 %v1089
    %v1125 = vpop.f32.mrb[0].mxu0
    %v1126 = vadd.f32 %v1067, %v1125
    %v1127 = vpop.f32.mrb[0].mxu0
    %v1128 = vpop.f32.mrb[0].mxu0
    %v1129 = vadd.f32 %v1067, %v1128
    %v1130 = vpop.f32.mrb[0].mxu0
    %1131 = vdwg.mxu0
    %v1132 = vadd.f32 %v845, %v1126
    %v1133 = vadd.f32 %v846, %v1129
    %1134 = vst [vmem:[#allocation2] sm:$0xff] %v1132
    %1135 = vst [vmem:[#allocation2 + $0x8] sm:$0xff] %v1133
    // Predicated region
    $region58: #{cross_channel_transformer_encoder_layer.1} parent=1 // pred_check
      _
    $region59: #{cross_channel_transformer_encoder_layer.1} parent=1 // pred_check_branch
      %1137 = sbr.rel (0) target = $region61
    $region60: #{cross_channel_transformer_encoder_layer.1} parent=1 // pred_region
      %s1139 = ssub.s32 256, 256
      %1140 = vsyncadd [#allocation3], %s1139
      %s1141 = sshll.u32 [#allocation2], 4
      %s1142 = int_to_ptr.vmem [resolvable:$true] %s1141
      %1147 = dma.vmem_to_hbm [thread:$0]  %s1142, 256, %s14, [#allocation3], 128, 128, 8
    $region61: #{cross_channel_transformer_encoder_layer.1} parent=1 // pred_fallthru
      _
    // Predicated region
    $region62: #{cross_channel_transformer_encoder_layer.1} parent=1 // pred_check
      _
    $region63: #{cross_channel_transformer_encoder_layer.1} parent=1 // pred_check_branch
      %1149 = sbr.rel (0) target = $region65
    $region64: #{cross_channel_transformer_encoder_layer.1} parent=1 // pred_region
      %1150 = dma.done [#allocation3], 256
    $region65: #{cross_channel_transformer_encoder_layer.1} parent=1 // pred_fallthru
      _
    %1151 = vsyncpa [#allocation3], 1

</llo_original>
